<compile_context>
chip_gen: v5e
topology: v5e:2x2
jax: 0.10.0
libtpu: 0.0.40
codegen_flags: <defaults>
</compile_context>

<pallas_src>
import jax
import jax.numpy as jnp
from jax.experimental import pallas as pl
from jax.experimental.pallas import tpu as pltpu

# Problem sizes (small, consistent with the module's forward).
B, H, W, C = 2, 8, 8, 32
NUM_HEADS = 4
N = H * W
BN = B * N
ROPE_BASE = float(C)   # module builds RoPE(dim) -> base = dim


def linear_attention_kernel(x_ref, win_ref, wext_ref, ca_ref, cb_ref, out_ref):
    # x_ref   : (BN, C)      f32   flattened activations (both batches stacked)
    # win_ref : (9, BN, C)   f32   pre-shifted zero-padded 3x3 LePE windows
    # wext_ref: (C, 4C)      bf16  [Wqk | Wqk @ P]  (pair-swap folded in)
    # ca_ref  : (BN+1, 4C)   f32   rows 0..BN-1 = [cos|cos|sgn_sin|sgn_sin] table
    #                              (tiled over batch), row BN = extended bias
    # cb_ref  : (C+10, C)    f32   rows 0..C-1 head mask, C..C+8 LePE taps, C+9 bias
    x = x_ref[...]                                        # (BN, C) f32
    x_bf = x.astype(jnp.bfloat16)

    # Fused projection: one lane-dense (BN, C) x (C, 4C) bf16 MXU matmul producing
    # [q | k | q_swapped | k_swapped], plus extended bias (f32 accumulate).
    qk_ext = jnp.dot(x_bf, wext_ref[...],
                     preferred_element_type=jnp.float32) + ca_ref[BN, :]   # (BN, 4C)

    # ELU(.) + 1 on the full 128-lane slab (permutation commutes with elementwise).
    qk_ext = jnp.where(qk_ext > 0, qk_ext + 1.0, jnp.exp(qk_ext))

    # RoPE: full-width multiply with the packed [cos | cos | sgn_sin | sgn_sin]
    # table, then fold the two 2C halves together.  Lanes [0:C] = q_rope,
    # lanes [C:2C] = k_rope.  All in f32.
    roped = ca_ref[0:BN, :] * qk_ext                      # (BN, 4C)
    qk_rope = roped[:, :2 * C] + roped[:, 2 * C:]         # (BN, 2C)

    q = qk_ext[:, :C]
    k = qk_ext[:, C:2 * C]
    q_rope = qk_rope[:, :C]
    k_rope = qk_rope[:, C:]

    mask = cb_ref[0:C, :]                                 # (C, C) block-diag 0/1
    mask_bf = mask.astype(jnp.bfloat16)

    # Per-batch attention: 2 unrolled iterations over sublane-aligned row slices.
    attn_parts = []
    for b in range(B):
        sl = slice(b * N, (b + 1) * N)
        q_b, k_b, v_b = q[sl], k[sl], x_bf[sl]
        qr_b, kr_b = q_rope[sl], k_rope[sl]

        # z: per-head <q, mean(k)> via the block-diagonal mask.  bf16 MXU operands,
        # f32 accumulation; reciprocal path stays f32 (denom > 0 since ELU+1 > 0).
        k_mean = jnp.mean(k_b, axis=0, keepdims=True)     # (1, C) f32
        denom = jnp.dot((q_b * k_mean).astype(jnp.bfloat16), mask_bf,
                        preferred_element_type=jnp.float32)
        z = pl.reciprocal(denom + 1e-6, approx=True)      # (N, C) f32

        # kv = (1/N) k_rope^T @ v, masked block-diagonal, then attn = q_rope @ kv.
        kv = jax.lax.dot_general(
            kr_b.astype(jnp.bfloat16), v_b, (((0,), (0,)), ((), ())),
            preferred_element_type=jnp.float32) * (1.0 / float(N))   # (C, C) f32
        kv_bf = (kv * mask).astype(jnp.bfloat16)
        attn_parts.append(
            jnp.dot(qr_b.astype(jnp.bfloat16), kv_bf,
                    preferred_element_type=jnp.float32) * z)         # (N, C) f32
    attn = jnp.concatenate(attn_parts, axis=0)            # (BN, C)

    # LePE depthwise 3x3: 9 aligned full-tile FMAs over pre-shifted windows.
    lw = cb_ref[C:C + 9, :]                               # (9, C)
    lepe = jnp.zeros((BN, C), jnp.float32)
    for t in range(9):
        lepe = lepe + win_ref[t] * lw[t]

    # Single fused store: attention + LePE + conv bias.
    out_ref[...] = attn + lepe + cb_ref[C + 9, :]


def rope_tables(h, w, c, base):
    """Interleaved cos and signed-sin tables for 2D RoPE over (h, w, c)."""
    k_max = c // 4
    theta = 1.0 / (base ** (jnp.arange(k_max, dtype=jnp.float32) / k_max))
    ii, jj = jnp.meshgrid(jnp.arange(h, dtype=jnp.float32),
                          jnp.arange(w, dtype=jnp.float32), indexing="ij")
    angles = jnp.concatenate([ii[..., None] * theta, jj[..., None] * theta],
                             axis=-1)                     # (h, w, c//2)
    cos_h, sin_h = jnp.cos(angles), jnp.sin(angles)
    cos_full = jnp.stack([cos_h, cos_h], axis=-1).reshape(h * w, c)
    sin_signed = jnp.stack([-sin_h, sin_h], axis=-1).reshape(h * w, c)
    return cos_full, sin_signed


def pair_swap_matrix(c):
    idx = jnp.arange(c)
    return jnp.zeros((c, c), jnp.float32).at[idx ^ 1, idx].set(1.0)


def head_mask_matrix(c, num_heads):
    hd = c // num_heads
    idx = jnp.arange(c)
    return (idx[:, None] // hd == idx[None, :] // hd).astype(jnp.float32)


@jax.jit
def linear_attention(x, wqk, bqk, lw, lb):
    b, h, w, c = x.shape
    n = h * w
    bn = b * n
    x_flat = x.reshape(bn, c)

    # LePE: pre-shift the 9 zero-padded 3x3 windows (layout plumbing only) so
    # every in-kernel tap is an aligned full-tile FMA.
    x_pad = jnp.pad(x, ((0, 0), (1, 1), (1, 1), (0, 0)))
    windows = jnp.stack(
        [x_pad[:, di:di + h, dj:dj + w, :].reshape(bn, c)
         for di in range(3) for dj in range(3)], axis=0)              # (9, bn, c)

    # Fused projection: fold the pair-swap permutation into the weights/bias.
    # Weight is only ever an MXU operand -> pre-cast to bf16 on the host.
    p2 = pair_swap_matrix(2 * c)
    w_ext = jnp.concatenate([wqk, wqk @ p2], axis=1).astype(jnp.bfloat16)  # (c, 4c)
    b_ext = jnp.concatenate([bqk, bqk @ p2], axis=1)                       # (1, 4c)

    # Packed f32 constants (cuts DMA descriptor count).
    # Pack A: rows 0..bn-1 = [cos | cos | sgn_sin | sgn_sin] tiled over batch,
    #         row bn = extended projection bias.
    cosf, sinf = rope_tables(h, w, c, ROPE_BASE)
    cs = jnp.concatenate([cosf, cosf, sinf, sinf], axis=1)                 # (n, 4c)
    pack_a = jnp.concatenate([jnp.tile(cs, (b, 1)), b_ext], axis=0)        # (bn+1, 4c)
    # Pack B: rows 0..c-1 block-diagonal head mask, c..c+8 LePE taps, c+9 conv bias.
    hmask = head_mask_matrix(c, NUM_HEADS)
    pack_b = jnp.concatenate([hmask, lw, lb], axis=0)                      # (c+10, c)

    out = pl.pallas_call(
        linear_attention_kernel,
        out_shape=jax.ShapeDtypeStruct((bn, c), jnp.float32),
        grid_spec=pltpu.PrefetchScalarGridSpec(
            num_scalar_prefetch=0,
            grid=(1,),   # single step over the whole batch (see header note re v7x)
            in_specs=[
                pl.BlockSpec((bn, c), lambda i: (0, 0)),
                pl.BlockSpec((9, bn, c), lambda i: (0, 0, 0)),
                pl.BlockSpec((c, 4 * c), lambda i: (0, 0)),
                pl.BlockSpec((bn + 1, 4 * c), lambda i: (0, 0)),
                pl.BlockSpec((c + 10, c), lambda i: (0, 0)),
            ],
            out_specs=pl.BlockSpec((bn, c), lambda i: (0, 0)),
        ),
        compiler_params=pltpu.CompilerParams(
            dimension_semantics=("arbitrary",)),
    )(x_flat, windows, w_ext, pack_a, pack_b)
    return out.reshape(b, n, c)


def ref_forward(x, wqk, bqk, lw, lb, num_heads):
    """Pure-JAX mirror of the PyTorch forward, for validation."""
    b, h, w, c = x.shape
    n = h * w
    hd = c // num_heads
    xf = x.reshape(b, n, c)
    qk = xf @ wqk + bqk[0]
    q, k, v = qk[..., :c], qk[..., c:], xf
    elu1 = lambda t: jnp.where(t > 0, t + 1.0, jnp.exp(t))
    q, k = elu1(q), elu1(k)

    k_max = c // 4
    theta = 1.0 / (ROPE_BASE ** (jnp.arange(k_max, dtype=jnp.float32) / k_max))
    ii, jj = jnp.meshgrid(jnp.arange(h, dtype=jnp.float32),
                          jnp.arange(w, dtype=jnp.float32), indexing="ij")
    angles = jnp.concatenate([ii[..., None] * theta, jj[..., None] * theta],
                             axis=-1).reshape(n, c // 2)
    cos_a, sin_a = jnp.cos(angles), jnp.sin(angles)

    def rope(t):
        tc = t.reshape(b, n, c // 2, 2)
        re, im = tc[..., 0], tc[..., 1]
        return jnp.stack([cos_a * re - sin_a * im,
                          sin_a * re + cos_a * im], axis=-1).reshape(b, n, c)

    q_rope, k_rope = rope(q), rope(k)
    split = lambda t: t.reshape(b, n, num_heads, hd).transpose(0, 2, 1, 3)
    qh, kh, vh, qrh, krh = map(split, (q, k, v, q_rope, k_rope))
    z = 1.0 / (jnp.einsum("bhnd,bhd->bhn", qh, kh.mean(axis=2)) + 1e-6)
    kv = jnp.einsum("bhnd,bhne->bhde", krh * n ** -0.5, vh * n ** -0.5)
    out = jnp.einsum("bhnd,bhde->bhne", qrh, kv) * z[..., None]
    out = out.transpose(0, 2, 1, 3).reshape(b, n, c)

    vp = jnp.pad(x, ((0, 0), (1, 1), (1, 1), (0, 0)))
    lepe = jnp.zeros_like(x)
    for di in range(3):
        for dj in range(3):
            lepe = lepe + vp[:, di:di + h, dj:dj + w, :] * lw[di * 3 + dj]
    lepe = lepe + lb[0]
    return out + lepe.reshape(b, n, c)


if __name__ == "__main__":
    key = jax.random.PRNGKey(0)
    kx, k1, k2, k3, k4 = jax.random.split(key, 5)
    # Deterministic synthetic parameters (shapes follow nn.Linear(C, 2C),
    # depthwise Conv2d(C, C, 3) -> (3*3, C) flattened, biases as rows).
    x = jax.random.normal(kx, (B, H, W, C), jnp.float32)
    wqk = jax.random.normal(k1, (C, 2 * C), jnp.float32) * 0.05
    bqk = jax.random.normal(k2, (1, 2 * C), jnp.float32) * 0.05
    lw = jax.random.normal(k3, (9, C), jnp.float32) * 0.1
    lb = jax.random.normal(k4, (1, C), jnp.float32) * 0.05

    out = linear_attention(x, wqk, bqk, lw, lb)
    jax.block_until_ready(out)

    ref = ref_forward(x, wqk, bqk, lw, lb, NUM_HEADS)
    if not jnp.allclose(out, ref, rtol=5e-2, atol=5e-2):
        max_err = float(jnp.max(jnp.abs(out - ref)))
        raise AssertionError(f"Pallas kernel mismatch vs JAX reference, max abs err={max_err}")
    print("KERNEL_OK")
</pallas_src>

<mosaic_0001>
module attributes {stable_mosaic.version = 11 : i64} {
  func.func @linear_attention_kernel(%arg0: i32, %arg1: memref<128x32xf32, #tpu.memory_space<vmem>>, %arg2: memref<9x128x32xf32, #tpu.memory_space<vmem>>, %arg3: memref<32x128xbf16, #tpu.memory_space<vmem>>, %arg4: memref<129x128xf32, #tpu.memory_space<vmem>>, %arg5: memref<42x32xf32, #tpu.memory_space<vmem>>, %arg6: memref<128x32xf32, #tpu.memory_space<vmem>>) attributes {dimension_semantics = [#tpu.dimension_semantics<arbitrary>], iteration_bounds = array<i64: 1>, scalar_prefetch = 0 : i64, scratch_operands = 0 : i64, tpu.core_type = #tpu.core_type<tc>, window_params = [{pipeline_mode = #tpu.pipeline_mode<synchronous>, transform_indices = @transform_0, window_bounds = array<i64: 128, 32>}, {pipeline_mode = #tpu.pipeline_mode<synchronous>, transform_indices = @transform_1, window_bounds = array<i64: 9, 128, 32>}, {pipeline_mode = #tpu.pipeline_mode<synchronous>, transform_indices = @transform_2, window_bounds = array<i64: 32, 128>}, {pipeline_mode = #tpu.pipeline_mode<synchronous>, transform_indices = @transform_3, window_bounds = array<i64: 129, 128>}, {pipeline_mode = #tpu.pipeline_mode<synchronous>, transform_indices = @transform_4, window_bounds = array<i64: 42, 32>}, {pipeline_mode = #tpu.pipeline_mode<synchronous>, transform_indices = @transform_5, window_bounds = array<i64: 128, 32>}]} {
    %c0 = arith.constant 0 : index
    %c0_0 = arith.constant 0 : index
    %0 = vector.load %arg1[%c0, %c0_0] : memref<128x32xf32, #tpu.memory_space<vmem>>, vector<128x32xf32>
    %1 = arith.truncf %0 : vector<128x32xf32> to vector<128x32xbf16>
    %c0_1 = arith.constant 0 : index
    %c0_2 = arith.constant 0 : index
    %2 = vector.load %arg3[%c0_1, %c0_2] : memref<32x128xbf16, #tpu.memory_space<vmem>>, vector<32x128xbf16>
    %cst = arith.constant dense<0.000000e+00> : vector<128x128xf32>
    %3 = tpu.matmul %1, %2, %cst {dimension_numbers = #tpu.dot_dimension_numbers<[1], [0], [0], [1], [0, 0, 1, 1], [], []>} : vector<128x32xbf16>, vector<32x128xbf16>, vector<128x128xf32> -> vector<128x128xf32>
    %c128 = arith.constant 128 : index
    %c0_3 = arith.constant 0 : index
    %4 = vector.load %arg4[%c128, %c0_3] : memref<129x128xf32, #tpu.memory_space<vmem>>, vector<1x128xf32>
    %5 = vector.shape_cast %4 : vector<1x128xf32> to vector<128xf32>
    %6 = vector.shape_cast %5 : vector<128xf32> to vector<1x128xf32>
    %7 = vector.broadcast %6 : vector<1x128xf32> to vector<128x128xf32>
    %8 = arith.addf %3, %7 : vector<128x128xf32>
    %cst_4 = arith.constant 0.000000e+00 : f32
    %9 = vector.broadcast %cst_4 : f32 to vector<128x128xf32>
    %10 = arith.cmpf ogt, %8, %9 : vector<128x128xf32>
    %cst_5 = arith.constant 1.000000e+00 : f32
    %11 = vector.broadcast %cst_5 : f32 to vector<128x128xf32>
    %12 = arith.addf %8, %11 : vector<128x128xf32>
    %13 = math.exp %8 : vector<128x128xf32>
    %14 = arith.select %10, %12, %13 : vector<128x128xi1>, vector<128x128xf32>
    %c0_6 = arith.constant 0 : index
    %c0_7 = arith.constant 0 : index
    %15 = vector.load %arg4[%c0_6, %c0_7] : memref<129x128xf32, #tpu.memory_space<vmem>>, vector<128x128xf32>
    %16 = arith.mulf %15, %14 : vector<128x128xf32>
    %17 = vector.extract_strided_slice %16 {offsets = [0, 0], sizes = [128, 64], strides = [1, 1]} : vector<128x128xf32> to vector<128x64xf32>
    %18 = vector.extract_strided_slice %16 {offsets = [0, 64], sizes = [128, 64], strides = [1, 1]} : vector<128x128xf32> to vector<128x64xf32>
    %19 = arith.addf %17, %18 : vector<128x64xf32>
    %20 = vector.extract_strided_slice %14 {offsets = [0, 0], sizes = [128, 32], strides = [1, 1]} : vector<128x128xf32> to vector<128x32xf32>
    %21 = vector.extract_strided_slice %14 {offsets = [0, 32], sizes = [128, 32], strides = [1, 1]} : vector<128x128xf32> to vector<128x32xf32>
    %22 = vector.extract_strided_slice %19 {offsets = [0, 0], sizes = [128, 32], strides = [1, 1]} : vector<128x64xf32> to vector<128x32xf32>
    %23 = vector.extract_strided_slice %19 {offsets = [0, 32], sizes = [128, 32], strides = [1, 1]} : vector<128x64xf32> to vector<128x32xf32>
    %c0_8 = arith.constant 0 : index
    %c0_9 = arith.constant 0 : index
    %24 = vector.load %arg5[%c0_8, %c0_9] : memref<42x32xf32, #tpu.memory_space<vmem>>, vector<32x32xf32>
    %25 = arith.truncf %24 : vector<32x32xf32> to vector<32x32xbf16>
    %26 = vector.extract_strided_slice %20 {offsets = [0, 0], sizes = [64, 32], strides = [1, 1]} : vector<128x32xf32> to vector<64x32xf32>
    %27 = vector.extract_strided_slice %21 {offsets = [0, 0], sizes = [64, 32], strides = [1, 1]} : vector<128x32xf32> to vector<64x32xf32>
    %28 = vector.extract_strided_slice %1 {offsets = [0, 0], sizes = [64, 32], strides = [1, 1]} : vector<128x32xbf16> to vector<64x32xbf16>
    %29 = vector.extract_strided_slice %22 {offsets = [0, 0], sizes = [64, 32], strides = [1, 1]} : vector<128x32xf32> to vector<64x32xf32>
    %30 = vector.extract_strided_slice %23 {offsets = [0, 0], sizes = [64, 32], strides = [1, 1]} : vector<128x32xf32> to vector<64x32xf32>
    %cst_10 = arith.constant dense<0.000000e+00> : vector<32xf32>
    %31 = vector.multi_reduction <add>, %27, %cst_10 [0] : vector<64x32xf32> to vector<32xf32>
    %32 = vector.shape_cast %31 : vector<32xf32> to vector<1x32xf32>
    %cst_11 = arith.constant 6.400000e+01 : f32
    %33 = vector.broadcast %cst_11 : f32 to vector<1x32xf32>
    %34 = arith.divf %32, %33 : vector<1x32xf32>
    %35 = vector.broadcast %34 : vector<1x32xf32> to vector<64x32xf32>
    %36 = arith.mulf %26, %35 : vector<64x32xf32>
    %37 = arith.truncf %36 : vector<64x32xf32> to vector<64x32xbf16>
    %cst_12 = arith.constant dense<0.000000e+00> : vector<64x32xf32>
    %38 = tpu.matmul %37, %25, %cst_12 {dimension_numbers = #tpu.dot_dimension_numbers<[1], [0], [0], [1], [0, 0, 1, 1], [], []>} : vector<64x32xbf16>, vector<32x32xbf16>, vector<64x32xf32> -> vector<64x32xf32>
    %cst_13 = arith.constant 9.99999997E-7 : f32
    %39 = vector.broadcast %cst_13 : f32 to vector<64x32xf32>
    %40 = arith.addf %38, %39 : vector<64x32xf32>
    %41 = tpu.reciprocal %40 {approx = true} : vector<64x32xf32> -> vector<64x32xf32>
    %42 = arith.truncf %30 : vector<64x32xf32> to vector<64x32xbf16>
    %cst_14 = arith.constant dense<0.000000e+00> : vector<32x32xf32>
    %43 = tpu.matmul %42, %28, %cst_14 {dimension_numbers = #tpu.dot_dimension_numbers<[0], [0], [1], [1], [0, 1, 1, 1], [], []>} : vector<64x32xbf16>, vector<64x32xbf16>, vector<32x32xf32> -> vector<32x32xf32>
    %cst_15 = arith.constant 1.562500e-02 : f32
    %44 = vector.broadcast %cst_15 : f32 to vector<32x32xf32>
    %45 = arith.mulf %43, %44 : vector<32x32xf32>
    %46 = arith.mulf %45, %24 : vector<32x32xf32>
    %47 = arith.truncf %46 : vector<32x32xf32> to vector<32x32xbf16>
    %48 = arith.truncf %29 : vector<64x32xf32> to vector<64x32xbf16>
    %cst_16 = arith.constant dense<0.000000e+00> : vector<64x32xf32>
    %49 = tpu.matmul %48, %47, %cst_16 {dimension_numbers = #tpu.dot_dimension_numbers<[1], [0], [0], [1], [0, 0, 1, 1], [], []>} : vector<64x32xbf16>, vector<32x32xbf16>, vector<64x32xf32> -> vector<64x32xf32>
    %50 = arith.mulf %49, %41 : vector<64x32xf32>
    %51 = vector.extract_strided_slice %20 {offsets = [64, 0], sizes = [64, 32], strides = [1, 1]} : vector<128x32xf32> to vector<64x32xf32>
    %52 = vector.extract_strided_slice %21 {offsets = [64, 0], sizes = [64, 32], strides = [1, 1]} : vector<128x32xf32> to vector<64x32xf32>
    %53 = vector.extract_strided_slice %1 {offsets = [64, 0], sizes = [64, 32], strides = [1, 1]} : vector<128x32xbf16> to vector<64x32xbf16>
    %54 = vector.extract_strided_slice %22 {offsets = [64, 0], sizes = [64, 32], strides = [1, 1]} : vector<128x32xf32> to vector<64x32xf32>
    %55 = vector.extract_strided_slice %23 {offsets = [64, 0], sizes = [64, 32], strides = [1, 1]} : vector<128x32xf32> to vector<64x32xf32>
    %cst_17 = arith.constant dense<0.000000e+00> : vector<32xf32>
    %56 = vector.multi_reduction <add>, %52, %cst_17 [0] : vector<64x32xf32> to vector<32xf32>
    %57 = vector.shape_cast %56 : vector<32xf32> to vector<1x32xf32>
    %cst_18 = arith.constant 6.400000e+01 : f32
    %58 = vector.broadcast %cst_18 : f32 to vector<1x32xf32>
    %59 = arith.divf %57, %58 : vector<1x32xf32>
    %60 = vector.broadcast %59 : vector<1x32xf32> to vector<64x32xf32>
    %61 = arith.mulf %51, %60 : vector<64x32xf32>
    %62 = arith.truncf %61 : vector<64x32xf32> to vector<64x32xbf16>
    %cst_19 = arith.constant dense<0.000000e+00> : vector<64x32xf32>
    %63 = tpu.matmul %62, %25, %cst_19 {dimension_numbers = #tpu.dot_dimension_numbers<[1], [0], [0], [1], [0, 0, 1, 1], [], []>} : vector<64x32xbf16>, vector<32x32xbf16>, vector<64x32xf32> -> vector<64x32xf32>
    %cst_20 = arith.constant 9.99999997E-7 : f32
    %64 = vector.broadcast %cst_20 : f32 to vector<64x32xf32>
    %65 = arith.addf %63, %64 : vector<64x32xf32>
    %66 = tpu.reciprocal %65 {approx = true} : vector<64x32xf32> -> vector<64x32xf32>
    %67 = arith.truncf %55 : vector<64x32xf32> to vector<64x32xbf16>
    %cst_21 = arith.constant dense<0.000000e+00> : vector<32x32xf32>
    %68 = tpu.matmul %67, %53, %cst_21 {dimension_numbers = #tpu.dot_dimension_numbers<[0], [0], [1], [1], [0, 1, 1, 1], [], []>} : vector<64x32xbf16>, vector<64x32xbf16>, vector<32x32xf32> -> vector<32x32xf32>
    %cst_22 = arith.constant 1.562500e-02 : f32
    %69 = vector.broadcast %cst_22 : f32 to vector<32x32xf32>
    %70 = arith.mulf %68, %69 : vector<32x32xf32>
    %71 = arith.mulf %70, %24 : vector<32x32xf32>
    %72 = arith.truncf %71 : vector<32x32xf32> to vector<32x32xbf16>
    %73 = arith.truncf %54 : vector<64x32xf32> to vector<64x32xbf16>
    %cst_23 = arith.constant dense<0.000000e+00> : vector<64x32xf32>
    %74 = tpu.matmul %73, %72, %cst_23 {dimension_numbers = #tpu.dot_dimension_numbers<[1], [0], [0], [1], [0, 0, 1, 1], [], []>} : vector<64x32xbf16>, vector<32x32xbf16>, vector<64x32xf32> -> vector<64x32xf32>
    %75 = arith.mulf %74, %66 : vector<64x32xf32>
    %76 = tpu.concatenate %50, %75 in 0 : vector<64x32xf32>, vector<64x32xf32> -> vector<128x32xf32>
    %c32 = arith.constant 32 : index
    %c0_24 = arith.constant 0 : index
    %77 = vector.load %arg5[%c32, %c0_24] : memref<42x32xf32, #tpu.memory_space<vmem>>, vector<9x32xf32>
    %cst_25 = arith.constant 0.000000e+00 : f32
    %78 = vector.broadcast %cst_25 : f32 to vector<128x32xf32>
    %c0_26 = arith.constant 0 : index
    %c0_27 = arith.constant 0 : index
    %c0_28 = arith.constant 0 : index
    %79 = vector.load %arg2[%c0_26, %c0_27, %c0_28] : memref<9x128x32xf32, #tpu.memory_space<vmem>>, vector<1x128x32xf32>
    %80 = vector.shape_cast %79 : vector<1x128x32xf32> to vector<128x32xf32>
    %81 = vector.extract_strided_slice %77 {offsets = [0, 0], sizes = [1, 32], strides = [1, 1]} : vector<9x32xf32> to vector<1x32xf32>
    %82 = vector.shape_cast %81 : vector<1x32xf32> to vector<32xf32>
    %83 = vector.shape_cast %82 : vector<32xf32> to vector<1x32xf32>
    %84 = vector.broadcast %83 : vector<1x32xf32> to vector<128x32xf32>
    %85 = arith.mulf %80, %84 : vector<128x32xf32>
    %86 = arith.addf %78, %85 : vector<128x32xf32>
    %c1 = arith.constant 1 : index
    %c0_29 = arith.constant 0 : index
    %c0_30 = arith.constant 0 : index
    %87 = vector.load %arg2[%c1, %c0_29, %c0_30] : memref<9x128x32xf32, #tpu.memory_space<vmem>>, vector<1x128x32xf32>
    %88 = vector.shape_cast %87 : vector<1x128x32xf32> to vector<128x32xf32>
    %89 = vector.extract_strided_slice %77 {offsets = [1, 0], sizes = [1, 32], strides = [1, 1]} : vector<9x32xf32> to vector<1x32xf32>
    %90 = vector.shape_cast %89 : vector<1x32xf32> to vector<32xf32>
    %91 = vector.shape_cast %90 : vector<32xf32> to vector<1x32xf32>
    %92 = vector.broadcast %91 : vector<1x32xf32> to vector<128x32xf32>
    %93 = arith.mulf %88, %92 : vector<128x32xf32>
    %94 = arith.addf %86, %93 : vector<128x32xf32>
    %c2 = arith.constant 2 : index
    %c0_31 = arith.constant 0 : index
    %c0_32 = arith.constant 0 : index
    %95 = vector.load %arg2[%c2, %c0_31, %c0_32] : memref<9x128x32xf32, #tpu.memory_space<vmem>>, vector<1x128x32xf32>
    %96 = vector.shape_cast %95 : vector<1x128x32xf32> to vector<128x32xf32>
    %97 = vector.extract_strided_slice %77 {offsets = [2, 0], sizes = [1, 32], strides = [1, 1]} : vector<9x32xf32> to vector<1x32xf32>
    %98 = vector.shape_cast %97 : vector<1x32xf32> to vector<32xf32>
    %99 = vector.shape_cast %98 : vector<32xf32> to vector<1x32xf32>
    %100 = vector.broadcast %99 : vector<1x32xf32> to vector<128x32xf32>
    %101 = arith.mulf %96, %100 : vector<128x32xf32>
    %102 = arith.addf %94, %101 : vector<128x32xf32>
    %c3 = arith.constant 3 : index
    %c0_33 = arith.constant 0 : index
    %c0_34 = arith.constant 0 : index
    %103 = vector.load %arg2[%c3, %c0_33, %c0_34] : memref<9x128x32xf32, #tpu.memory_space<vmem>>, vector<1x128x32xf32>
    %104 = vector.shape_cast %103 : vector<1x128x32xf32> to vector<128x32xf32>
    %105 = vector.extract_strided_slice %77 {offsets = [3, 0], sizes = [1, 32], strides = [1, 1]} : vector<9x32xf32> to vector<1x32xf32>
    %106 = vector.shape_cast %105 : vector<1x32xf32> to vector<32xf32>
    %107 = vector.shape_cast %106 : vector<32xf32> to vector<1x32xf32>
    %108 = vector.broadcast %107 : vector<1x32xf32> to vector<128x32xf32>
    %109 = arith.mulf %104, %108 : vector<128x32xf32>
    %110 = arith.addf %102, %109 : vector<128x32xf32>
    %c4 = arith.constant 4 : index
    %c0_35 = arith.constant 0 : index
    %c0_36 = arith.constant 0 : index
    %111 = vector.load %arg2[%c4, %c0_35, %c0_36] : memref<9x128x32xf32, #tpu.memory_space<vmem>>, vector<1x128x32xf32>
    %112 = vector.shape_cast %111 : vector<1x128x32xf32> to vector<128x32xf32>
    %113 = vector.extract_strided_slice %77 {offsets = [4, 0], sizes = [1, 32], strides = [1, 1]} : vector<9x32xf32> to vector<1x32xf32>
    %114 = vector.shape_cast %113 : vector<1x32xf32> to vector<32xf32>
    %115 = vector.shape_cast %114 : vector<32xf32> to vector<1x32xf32>
    %116 = vector.broadcast %115 : vector<1x32xf32> to vector<128x32xf32>
    %117 = arith.mulf %112, %116 : vector<128x32xf32>
    %118 = arith.addf %110, %117 : vector<128x32xf32>
    %c5 = arith.constant 5 : index
    %c0_37 = arith.constant 0 : index
    %c0_38 = arith.constant 0 : index
    %119 = vector.load %arg2[%c5, %c0_37, %c0_38] : memref<9x128x32xf32, #tpu.memory_space<vmem>>, vector<1x128x32xf32>
    %120 = vector.shape_cast %119 : vector<1x128x32xf32> to vector<128x32xf32>
    %121 = vector.extract_strided_slice %77 {offsets = [5, 0], sizes = [1, 32], strides = [1, 1]} : vector<9x32xf32> to vector<1x32xf32>
    %122 = vector.shape_cast %121 : vector<1x32xf32> to vector<32xf32>
    %123 = vector.shape_cast %122 : vector<32xf32> to vector<1x32xf32>
    %124 = vector.broadcast %123 : vector<1x32xf32> to vector<128x32xf32>
    %125 = arith.mulf %120, %124 : vector<128x32xf32>
    %126 = arith.addf %118, %125 : vector<128x32xf32>
    %c6 = arith.constant 6 : index
    %c0_39 = arith.constant 0 : index
    %c0_40 = arith.constant 0 : index
    %127 = vector.load %arg2[%c6, %c0_39, %c0_40] : memref<9x128x32xf32, #tpu.memory_space<vmem>>, vector<1x128x32xf32>
    %128 = vector.shape_cast %127 : vector<1x128x32xf32> to vector<128x32xf32>
    %129 = vector.extract_strided_slice %77 {offsets = [6, 0], sizes = [1, 32], strides = [1, 1]} : vector<9x32xf32> to vector<1x32xf32>
    %130 = vector.shape_cast %129 : vector<1x32xf32> to vector<32xf32>
    %131 = vector.shape_cast %130 : vector<32xf32> to vector<1x32xf32>
    %132 = vector.broadcast %131 : vector<1x32xf32> to vector<128x32xf32>
    %133 = arith.mulf %128, %132 : vector<128x32xf32>
    %134 = arith.addf %126, %133 : vector<128x32xf32>
    %c7 = arith.constant 7 : index
    %c0_41 = arith.constant 0 : index
    %c0_42 = arith.constant 0 : index
    %135 = vector.load %arg2[%c7, %c0_41, %c0_42] : memref<9x128x32xf32, #tpu.memory_space<vmem>>, vector<1x128x32xf32>
    %136 = vector.shape_cast %135 : vector<1x128x32xf32> to vector<128x32xf32>
    %137 = vector.extract_strided_slice %77 {offsets = [7, 0], sizes = [1, 32], strides = [1, 1]} : vector<9x32xf32> to vector<1x32xf32>
    %138 = vector.shape_cast %137 : vector<1x32xf32> to vector<32xf32>
    %139 = vector.shape_cast %138 : vector<32xf32> to vector<1x32xf32>
    %140 = vector.broadcast %139 : vector<1x32xf32> to vector<128x32xf32>
    %141 = arith.mulf %136, %140 : vector<128x32xf32>
    %142 = arith.addf %134, %141 : vector<128x32xf32>
    %c8 = arith.constant 8 : index
    %c0_43 = arith.constant 0 : index
    %c0_44 = arith.constant 0 : index
    %143 = vector.load %arg2[%c8, %c0_43, %c0_44] : memref<9x128x32xf32, #tpu.memory_space<vmem>>, vector<1x128x32xf32>
    %144 = vector.shape_cast %143 : vector<1x128x32xf32> to vector<128x32xf32>
    %145 = vector.extract_strided_slice %77 {offsets = [8, 0], sizes = [1, 32], strides = [1, 1]} : vector<9x32xf32> to vector<1x32xf32>
    %146 = vector.shape_cast %145 : vector<1x32xf32> to vector<32xf32>
    %147 = vector.shape_cast %146 : vector<32xf32> to vector<1x32xf32>
    %148 = vector.broadcast %147 : vector<1x32xf32> to vector<128x32xf32>
    %149 = arith.mulf %144, %148 : vector<128x32xf32>
    %150 = arith.addf %142, %149 : vector<128x32xf32>
    %151 = arith.addf %76, %150 : vector<128x32xf32>
    %c41 = arith.constant 41 : index
    %c0_45 = arith.constant 0 : index
    %152 = vector.load %arg5[%c41, %c0_45] : memref<42x32xf32, #tpu.memory_space<vmem>>, vector<1x32xf32>
    %153 = vector.shape_cast %152 : vector<1x32xf32> to vector<32xf32>
    %154 = vector.shape_cast %153 : vector<32xf32> to vector<1x32xf32>
    %155 = vector.broadcast %154 : vector<1x32xf32> to vector<128x32xf32>
    %156 = arith.addf %151, %155 : vector<128x32xf32>
    %c0_46 = arith.constant 0 : index
    %c0_47 = arith.constant 0 : index
    %157 = vector.load %arg6[%c0_46, %c0_47] : memref<128x32xf32, #tpu.memory_space<vmem>>, vector<128x32xf32>
    tpu.vector_store %arg6[%c0_46, %c0_47], %156 {strides = array<i32>} : memref<128x32xf32, #tpu.memory_space<vmem>>, vector<128x32xf32>,
    return
  }
  func.func @transform_0(%arg0: i32) -> (i32, i32) {
    %c0_i32 = arith.constant 0 : i32
    %c0_i32_0 = arith.constant 0 : i32
    %c0_i32_1 = arith.constant 0 : i32
    return %c0_i32, %c0_i32_0 : i32, i32
  }
  func.func @transform_1(%arg0: i32) -> (i32, i32, i32) {
    %c0_i32 = arith.constant 0 : i32
    %c0_i32_0 = arith.constant 0 : i32
    %c0_i32_1 = arith.constant 0 : i32
    %c0_i32_2 = arith.constant 0 : i32
    return %c0_i32, %c0_i32_0, %c0_i32_1 : i32, i32, i32
  }
  func.func @transform_2(%arg0: i32) -> (i32, i32) {
    %c0_i32 = arith.constant 0 : i32
    %c0_i32_0 = arith.constant 0 : i32
    %c0_i32_1 = arith.constant 0 : i32
    return %c0_i32, %c0_i32_0 : i32, i32
  }
  func.func @transform_3(%arg0: i32) -> (i32, i32) {
    %c0_i32 = arith.constant 0 : i32
    %c0_i32_0 = arith.constant 0 : i32
    %c0_i32_1 = arith.constant 0 : i32
    return %c0_i32, %c0_i32_0 : i32, i32
  }
  func.func @transform_4(%arg0: i32) -> (i32, i32) {
    %c0_i32 = arith.constant 0 : i32
    %c0_i32_0 = arith.constant 0 : i32
    %c0_i32_1 = arith.constant 0 : i32
    return %c0_i32, %c0_i32_0 : i32, i32
  }
  func.func @transform_5(%arg0: i32) -> (i32, i32) {
    %c0_i32 = arith.constant 0 : i32
    %c0_i32_0 = arith.constant 0 : i32
    %c0_i32_1 = arith.constant 0 : i32
    return %c0_i32, %c0_i32_0 : i32, i32
  }
}

</mosaic_0001>

<llo_original>
// kernel: linear_attention.1
$region0: #{linear_attention.1}
  #allocation0 [shape = 'u32[]', space=smem, size = 0x4, offset = 0x4, fixed_abs, tag = 'smem constant byte address 0x4 - core index']
  #allocation1 [shape = 'u32[72,128]{1,0:T(1,128)}', space=vmem, size = 0x9000, scoped, tag = 'internal scratch']
  %s0 = inlined_call_operand.vmem [shape: f32[128,32], index: 0, kind: input, shape index: {}]
  %s1 = inlined_call_operand.vmem [shape: f32[9,128,32], index: 1, kind: input, shape index: {}]
  %s2 = inlined_call_operand.vmem [shape: bf16[32,128], index: 2, kind: input, shape index: {}]
  %s3 = inlined_call_operand.vmem [shape: f32[129,128], index: 3, kind: input, shape index: {}]
  %s4 = inlined_call_operand.vmem [shape: f32[42,32], index: 4, kind: input, shape index: {}]
  %s5 = inlined_call_operand.vmem [shape: f32[128,32], index: 5, kind: output, shape index: {}]
  %s6 = sld [smem:[#allocation0]]
  $region30: #{linear_attention.1} parent=0
    _
  %s8 = ssub.s32 1, %s6
  %s9 = scalar_select 0, %s8, %s6
  // Predicated region
  $region2: #{linear_attention.1} parent=0 // pred_check
    _
  $region3: #{linear_attention.1} parent=0 // pred_check_branch
    %11 = sbr.rel (0) target = $region5
  $region4: #{linear_attention.1} parent=0 // pred_region
    _
  $region5: #{linear_attention.1} parent=0 // pred_fallthru
    _
  // Predicated region
  $region6: #{linear_attention.1} parent=0 // pred_check
    _
  $region7: #{linear_attention.1} parent=0 // pred_check_branch
    %13 = sbr.rel (0) target = $region9
  $region8: #{linear_attention.1} parent=0 // pred_region
    _
  $region9: #{linear_attention.1} parent=0 // pred_fallthru
    _
  // Predicated region
  $region10: #{linear_attention.1} parent=0 // pred_check
    _
  $region11: #{linear_attention.1} parent=0 // pred_check_branch
    %15 = sbr.rel (0) target = $region13
  $region12: #{linear_attention.1} parent=0 // pred_region
    _
  $region13: #{linear_attention.1} parent=0 // pred_fallthru
    _
  // Predicated region
  $region14: #{linear_attention.1} parent=0 // pred_check
    _
  $region15: #{linear_attention.1} parent=0 // pred_check_branch
    %17 = sbr.rel (0) target = $region17
  $region16: #{linear_attention.1} parent=0 // pred_region
    _
  $region17: #{linear_attention.1} parent=0 // pred_fallthru
    _
  // Predicated region
  $region18: #{linear_attention.1} parent=0 // pred_check
    _
  $region19: #{linear_attention.1} parent=0 // pred_check_branch
    %19 = sbr.rel (0) target = $region21
  $region20: #{linear_attention.1} parent=0 // pred_region
    _
  $region21: #{linear_attention.1} parent=0 // pred_fallthru
    _
  %v21 = vld [vmem:[%s0] sm:$0xff]
  %v22 = vld [vmem:[%s0 + $0x8] sm:$0xff]
  %v23 = vld [vmem:[%s0 + $0x10] sm:$0xff]
  %v24 = vld [vmem:[%s0 + $0x18] sm:$0xff]
  %v25 = vld [vmem:[%s0 + $0x20] sm:$0xff]
  %v26 = vld [vmem:[%s0 + $0x28] sm:$0xff]
  %v27 = vld [vmem:[%s0 + $0x30] sm:$0xff]
  %v28 = vld [vmem:[%s0 + $0x38] sm:$0xff]
  %v29 = vld [vmem:[%s0 + $0x40] sm:$0xff]
  %v30 = vld [vmem:[%s0 + $0x48] sm:$0xff]
  %v31 = vld [vmem:[%s0 + $0x50] sm:$0xff]
  %v32 = vld [vmem:[%s0 + $0x58] sm:$0xff]
  %v33 = vld [vmem:[%s0 + $0x60] sm:$0xff]
  %v34 = vld [vmem:[%s0 + $0x68] sm:$0xff]
  %v35 = vld [vmem:[%s0 + $0x70] sm:$0xff]
  %v36 = vld [vmem:[%s0 + $0x78] sm:$0xff]
  %v37 = vpack.c.bf16 %v21, %v21
  %v38 = vpack.c.bf16 %v22, %v22
  %v39 = vpack.c.bf16 %v23, %v23
  %v40 = vpack.c.bf16 %v24, %v24
  %v41 = vpack.c.bf16 %v25, %v25
  %v42 = vpack.c.bf16 %v26, %v26
  %v43 = vpack.c.bf16 %v27, %v27
  %v44 = vpack.c.bf16 %v28, %v28
  %v45 = vpack.c.bf16 %v29, %v29
  %v46 = vpack.c.bf16 %v30, %v30
  %v47 = vpack.c.bf16 %v31, %v31
  %v48 = vpack.c.bf16 %v32, %v32
  %v49 = vpack.c.bf16 %v33, %v33
  %v50 = vpack.c.bf16 %v34, %v34
  %v51 = vpack.c.bf16 %v35, %v35
  %v52 = vpack.c.bf16 %v36, %v36
  %v53 = vld [vmem:[%s2] sm:$0xf]
  %v54 = vld [vmem:[%s2 + $0x4] sm:$0xf]
  %v55 = vld [vmem:[%s2 + $0x8] sm:$0xf]
  %v56 = vld [vmem:[%s2 + $0xc] sm:$0xf]
  %v57 = vld [vmem:[%s3 + $0x80] sm:$0x1]
  %v58 = vperm.slane %v57, 0
  %v75 = vunpack.c.l.b16 %v37
  %v76 = vunpack.c.l.b16 %v38
  %v77 = vunpack.c.l.b16 %v39
  %v78 = vunpack.c.l.b16 %v40
  %v79 = vunpack.c.l.b16 %v41
  %v80 = vunpack.c.l.b16 %v42
  %v81 = vunpack.c.l.b16 %v43
  %v82 = vunpack.c.l.b16 %v44
  %v83 = vunpack.c.l.b16 %v45
  %v84 = vunpack.c.l.b16 %v46
  %v85 = vunpack.c.l.b16 %v47
  %v86 = vunpack.c.l.b16 %v48
  %v87 = vunpack.c.l.b16 %v49
  %v88 = vunpack.c.l.b16 %v50
  %v89 = vunpack.c.l.b16 %v51
  %v90 = vunpack.c.l.b16 %v52
  %v91 = vpack.c.b16 %v76, %v75
  %v92 = vpack.c.b16 %v78, %v77
  %v93 = vpack.c.b16 %v80, %v79
  %v94 = vpack.c.b16 %v82, %v81
  %v95 = vpack.c.b16 %v84, %v83
  %v96 = vpack.c.b16 %v86, %v85
  %v97 = vpack.c.b16 %v88, %v87
  %v98 = vpack.c.b16 %v90, %v89
  %v103 = vunpack.c.l.b16 %v53
  %v104 = vunpack.c.l.b16 %v54
  %v105 = vunpack.c.l.b16 %v55
  %v106 = vunpack.c.l.b16 %v56
  %v107 = vpack.c.b16 %v104, %v103
  %v108 = vpack.c.b16 %v106, %v105
  %vm111 = vcmask 261120
  %v113 = vsel %vm111, %v91, 0
  %v116 = vsel %vm111, %v92, 0
  %v119 = vsel %vm111, %v93, 0
  %v122 = vsel %vm111, %v94, 0
  %v125 = vsel %vm111, %v95, 0
  %v128 = vsel %vm111, %v96, 0
  %v131 = vsel %vm111, %v97, 0
  %v134 = vsel %vm111, %v98, 0
  %136 = vmatpush.bf16.msra.mxu0 0
  %137 = vmatpush.bf16.msra.mxu0 0
  %138 = vmatpush.bf16.msra.mxu0 0
  %139 = vmatpush.bf16.msra.mxu0 0
  %140 = vmatpush.bf16.msra.mxu0 0
  %141 = vmatpush.bf16.msra.mxu0 0
  %142 = vmatpush.bf16.msra.mxu0 %v108
  %143 = vmatpush.bf16.msra.mxu0 %v107
  %144 = vmatmul.bf16.gmra.mxu0 %v113
  %v145 = vpop.f32.mrf.mxu0
  %v146 = vadd.f32 %v58, %v145
  %v147 = vpop.f32.mrf.mxu0
  %v148 = vadd.f32 %v58, %v147
  %149 = vmatmul.bf16.gmra.mxu0 %v116
  %v150 = vpop.f32.mrf.mxu0
  %v151 = vadd.f32 %v58, %v150
  %v152 = vpop.f32.mrf.mxu0
  %v153 = vadd.f32 %v58, %v152
  %154 = vmatmul.bf16.gmra.mxu0 %v119
  %v155 = vpop.f32.mrf.mxu0
  %v156 = vadd.f32 %v58, %v155
  %v157 = vpop.f32.mrf.mxu0
  %v158 = vadd.f32 %v58, %v157
  %159 = vmatmul.bf16.gmra.mxu0 %v122
  %v160 = vpop.f32.mrf.mxu0
  %v161 = vadd.f32 %v58, %v160
  %v162 = vpop.f32.mrf.mxu0
  %v163 = vadd.f32 %v58, %v162
  %164 = vmatmul.bf16.gmra.mxu0 %v125
  %v165 = vpop.f32.mrf.mxu0
  %v166 = vadd.f32 %v58, %v165
  %v167 = vpop.f32.mrf.mxu0
  %v168 = vadd.f32 %v58, %v167
  %169 = vmatmul.bf16.gmra.mxu0 %v128
  %v170 = vpop.f32.mrf.mxu0
  %v171 = vadd.f32 %v58, %v170
  %v172 = vpop.f32.mrf.mxu0
  %v173 = vadd.f32 %v58, %v172
  %174 = vmatmul.bf16.gmra.mxu0 %v131
  %v175 = vpop.f32.mrf.mxu0
  %v176 = vadd.f32 %v58, %v175
  %v177 = vpop.f32.mrf.mxu0
  %v178 = vadd.f32 %v58, %v177
  %179 = vmatmul.bf16.gmra.mxu0 %v134
  %v180 = vpop.f32.mrf.mxu0
  %v181 = vadd.f32 %v58, %v180
  %v182 = vpop.f32.mrf.mxu0
  %v183 = vadd.f32 %v58, %v182
  %184 = vdwg.mxu0
  %vm185 = vcmp.gt.f32.partialorder %v146, 0.0
  %vm186 = vcmp.gt.f32.partialorder %v148, 0.0
  %vm187 = vcmp.gt.f32.partialorder %v151, 0.0
  %vm188 = vcmp.gt.f32.partialorder %v153, 0.0
  %vm189 = vcmp.gt.f32.partialorder %v156, 0.0
  %vm190 = vcmp.gt.f32.partialorder %v158, 0.0
  %vm191 = vcmp.gt.f32.partialorder %v161, 0.0
  %vm192 = vcmp.gt.f32.partialorder %v163, 0.0
  %vm193 = vcmp.gt.f32.partialorder %v166, 0.0
  %vm194 = vcmp.gt.f32.partialorder %v168, 0.0
  %vm195 = vcmp.gt.f32.partialorder %v171, 0.0
  %vm196 = vcmp.gt.f32.partialorder %v173, 0.0
  %vm197 = vcmp.gt.f32.partialorder %v176, 0.0
  %vm198 = vcmp.gt.f32.partialorder %v178, 0.0
  %vm199 = vcmp.gt.f32.partialorder %v181, 0.0
  %vm200 = vcmp.gt.f32.partialorder %v183, 0.0
  %v201 = vadd.f32 %v146, 1.0
  %v202 = vadd.f32 %v148, 1.0
  %v203 = vadd.f32 %v151, 1.0
  %v204 = vadd.f32 %v153, 1.0
  %v205 = vadd.f32 %v156, 1.0
  %v206 = vadd.f32 %v158, 1.0
  %v207 = vadd.f32 %v161, 1.0
  %v208 = vadd.f32 %v163, 1.0
  %v209 = vadd.f32 %v166, 1.0
  %v210 = vadd.f32 %v168, 1.0
  %v211 = vadd.f32 %v171, 1.0
  %v212 = vadd.f32 %v173, 1.0
  %v213 = vadd.f32 %v176, 1.0
  %v214 = vadd.f32 %v178, 1.0
  %v215 = vadd.f32 %v181, 1.0
  %v216 = vadd.f32 %v183, 1.0
  %v217 = vmul.f32 %v146, 1.442695
  %v218 = vpow.pop %v217
  %v219 = vmul.f32 %v148, 1.442695
  %v220 = vpow.pop %v219
  %v221 = vmul.f32 %v151, 1.442695
  %v222 = vpow.pop %v221
  %v223 = vmul.f32 %v153, 1.442695
  %v224 = vpow.pop %v223
  %v225 = vmul.f32 %v156, 1.442695
  %v226 = vpow.pop %v225
  %v227 = vmul.f32 %v158, 1.442695
  %v228 = vpow.pop %v227
  %v229 = vmul.f32 %v161, 1.442695
  %v230 = vpow.pop %v229
  %v231 = vmul.f32 %v163, 1.442695
  %v232 = vpow.pop %v231
  %v233 = vmul.f32 %v166, 1.442695
  %v234 = vpow.pop %v233
  %v235 = vmul.f32 %v168, 1.442695
  %v236 = vpow.pop %v235
  %v237 = vmul.f32 %v171, 1.442695
  %v238 = vpow.pop %v237
  %v239 = vmul.f32 %v173, 1.442695
  %v240 = vpow.pop %v239
  %v241 = vmul.f32 %v176, 1.442695
  %v242 = vpow.pop %v241
  %v243 = vmul.f32 %v178, 1.442695
  %v244 = vpow.pop %v243
  %v245 = vmul.f32 %v181, 1.442695
  %v246 = vpow.pop %v245
  %v247 = vmul.f32 %v183, 1.442695
  %v248 = vpow.pop %v247
  %v249 = vsel %vm185, %v201, %v218
  %v250 = vsel %vm186, %v202, %v220
  %v251 = vsel %vm187, %v203, %v222
  %v252 = vsel %vm188, %v204, %v224
  %v253 = vsel %vm189, %v205, %v226
  %v254 = vsel %vm190, %v206, %v228
  %v255 = vsel %vm191, %v207, %v230
  %v256 = vsel %vm192, %v208, %v232
  %v257 = vsel %vm193, %v209, %v234
  %v258 = vsel %vm194, %v210, %v236
  %v259 = vsel %vm195, %v211, %v238
  %v260 = vsel %vm196, %v212, %v240
  %v261 = vsel %vm197, %v213, %v242
  %v262 = vsel %vm198, %v214, %v244
  %v263 = vsel %vm199, %v215, %v246
  %v264 = vsel %vm200, %v216, %v248
  %v265 = vld [vmem:[%s3] sm:$0xff]
  %v266 = vld [vmem:[%s3 + $0x8] sm:$0xff]
  %v267 = vld [vmem:[%s3 + $0x10] sm:$0xff]
  %v268 = vld [vmem:[%s3 + $0x18] sm:$0xff]
  %v269 = vld [vmem:[%s3 + $0x20] sm:$0xff]
  %v270 = vld [vmem:[%s3 + $0x28] sm:$0xff]
  %v271 = vld [vmem:[%s3 + $0x30] sm:$0xff]
  %v272 = vld [vmem:[%s3 + $0x38] sm:$0xff]
  %v273 = vld [vmem:[%s3 + $0x40] sm:$0xff]
  %v274 = vld [vmem:[%s3 + $0x48] sm:$0xff]
  %v275 = vld [vmem:[%s3 + $0x50] sm:$0xff]
  %v276 = vld [vmem:[%s3 + $0x58] sm:$0xff]
  %v277 = vld [vmem:[%s3 + $0x60] sm:$0xff]
  %v278 = vld [vmem:[%s3 + $0x68] sm:$0xff]
  %v279 = vld [vmem:[%s3 + $0x70] sm:$0xff]
  %v280 = vld [vmem:[%s3 + $0x78] sm:$0xff]
  %v281 = vmul.f32 %v265, %v249
  %v282 = vmul.f32 %v266, %v250
  %v283 = vmul.f32 %v267, %v251
  %v284 = vmul.f32 %v268, %v252
  %v285 = vmul.f32 %v269, %v253
  %v286 = vmul.f32 %v270, %v254
  %v287 = vmul.f32 %v271, %v255
  %v288 = vmul.f32 %v272, %v256
  %v289 = vmul.f32 %v273, %v257
  %v290 = vmul.f32 %v274, %v258
  %v291 = vmul.f32 %v275, %v259
  %v292 = vmul.f32 %v276, %v260
  %v293 = vmul.f32 %v277, %v261
  %v294 = vmul.f32 %v278, %v262
  %v295 = vmul.f32 %v279, %v263
  %v296 = vmul.f32 %v280, %v264
  %313 = vrot.lane.b32.xlu0 %v281, 64
  %v314 = vpop.permute.xlu0 %313
  %315 = vrot.lane.b32.xlu0 %v282, 64
  %v316 = vpop.permute.xlu0 %315
  %317 = vrot.lane.b32.xlu0 %v283, 64
  %v318 = vpop.permute.xlu0 %317
  %319 = vrot.lane.b32.xlu0 %v284, 64
  %v320 = vpop.permute.xlu0 %319
  %321 = vrot.lane.b32.xlu0 %v285, 64
  %v322 = vpop.permute.xlu0 %321
  %323 = vrot.lane.b32.xlu0 %v286, 64
  %v324 = vpop.permute.xlu0 %323
  %325 = vrot.lane.b32.xlu0 %v287, 64
  %v326 = vpop.permute.xlu0 %325
  %327 = vrot.lane.b32.xlu0 %v288, 64
  %v328 = vpop.permute.xlu0 %327
  %329 = vrot.lane.b32.xlu0 %v289, 64
  %v330 = vpop.permute.xlu0 %329
  %331 = vrot.lane.b32.xlu0 %v290, 64
  %v332 = vpop.permute.xlu0 %331
  %333 = vrot.lane.b32.xlu0 %v291, 64
  %v334 = vpop.permute.xlu0 %333
  %335 = vrot.lane.b32.xlu0 %v292, 64
  %v336 = vpop.permute.xlu0 %335
  %337 = vrot.lane.b32.xlu0 %v293, 64
  %v338 = vpop.permute.xlu0 %337
  %339 = vrot.lane.b32.xlu0 %v294, 64
  %v340 = vpop.permute.xlu0 %339
  %341 = vrot.lane.b32.xlu0 %v295, 64
  %v342 = vpop.permute.xlu0 %341
  %343 = vrot.lane.b32.xlu0 %v296, 64
  %v344 = vpop.permute.xlu0 %343
  %v361 = vadd.f32 %v281, %v314
  %v362 = vadd.f32 %v282, %v316
  %v363 = vadd.f32 %v283, %v318
  %v364 = vadd.f32 %v284, %v320
  %v365 = vadd.f32 %v285, %v322
  %v366 = vadd.f32 %v286, %v324
  %v367 = vadd.f32 %v287, %v326
  %v368 = vadd.f32 %v288, %v328
  %v369 = vadd.f32 %v289, %v330
  %v370 = vadd.f32 %v290, %v332
  %v371 = vadd.f32 %v291, %v334
  %v372 = vadd.f32 %v292, %v336
  %v373 = vadd.f32 %v293, %v338
  %v374 = vadd.f32 %v294, %v340
  %v375 = vadd.f32 %v295, %v342
  %v376 = vadd.f32 %v296, %v344
  %v377 = vld [vmem:[%s4] sm:$0xff]
  %v378 = vld [vmem:[%s4 + $0x8] sm:$0xff]
  %v379 = vld [vmem:[%s4 + $0x10] sm:$0xff]
  %v380 = vld [vmem:[%s4 + $0x18] sm:$0xff]
  %v381 = vpack.c.bf16 %v378, %v377
  %v382 = vpack.c.bf16 %v380, %v379
  %vm383 = vcmask 523520
  %v384 = vsel %vm383, %v249, 0.0
  %v385 = vsel %vm383, %v250, 0.0
  %v386 = vadd.f32 %v384, %v385
  %v387 = vsel %vm383, %v251, 0.0
  %v388 = vadd.f32 %v386, %v387
  %v389 = vsel %vm383, %v252, 0.0
  %v390 = vadd.f32 %v388, %v389
  %v391 = vsel %vm383, %v253, 0.0
  %v392 = vadd.f32 %v390, %v391
  %v393 = vsel %vm383, %v254, 0.0
  %v394 = vadd.f32 %v392, %v393
  %v395 = vsel %vm383, %v255, 0.0
  %v396 = vadd.f32 %v394, %v395
  %v397 = vsel %vm383, %v256, 0.0
  %v398 = vadd.f32 %v396, %v397
  %v399 = vrot.slane %v398, 4
  %v400 = vadd.f32 %v398, %v399
  %v401 = vrot.slane %v400, 2
  %v402 = vadd.f32 %v400, %v401
  %v403 = vrot.slane %v402, 1
  %v404 = vadd.f32 %v402, %v403
  %v405 = vrcp.pop 64.0
  %v406 = vmul.f32 64.0, %v405
  %v407 = vsub.f32 1.0, %v406
  %v408 = vmul.f32 %v405, %v407
  %v409 = vadd.f32 %v405, %v408
  %vm410 = vweird.f32 %v405
  %v411 = vsel %vm410, %v405, %v409
  %v412 = vmul.f32 %v404, %v411
  %414 = vrot.lane.b32.xlu0 %v412, 96
  %v415 = vpop.permute.xlu0 %414
  %v417 = vmul.f32 %v249, %v415
  %v418 = vmul.f32 %v250, %v415
  %v419 = vmul.f32 %v251, %v415
  %v420 = vmul.f32 %v252, %v415
  %v421 = vmul.f32 %v253, %v415
  %v422 = vmul.f32 %v254, %v415
  %v423 = vmul.f32 %v255, %v415
  %v424 = vmul.f32 %v256, %v415
  %v425 = vpack.c.bf16 %v418, %v417
  %v426 = vpack.c.bf16 %v420, %v419
  %v427 = vpack.c.bf16 %v422, %v421
  %v428 = vpack.c.bf16 %v424, %v423
  %v430 = vsel %vm111, %v425, 0
  %v433 = vsel %vm111, %v426, 0
  %v436 = vsel %vm111, %v427, 0
  %v439 = vsel %vm111, %v428, 0
  %441 = vmatpush.bf16.msra.mxu0 0
  %442 = vmatpush.bf16.msra.mxu0 0
  %443 = vmatpush.bf16.msra.mxu0 0
  %444 = vmatpush.bf16.msra.mxu0 0
  %445 = vmatpush.bf16.msra.mxu0 0
  %446 = vmatpush.bf16.msra.mxu0 0
  %447 = vmatpush.bf16.msra.mxu0 %v382
  %448 = vmatpush.bf16.msra.mxu0 %v381
  %449 = vmatmul.bf16.gmra.mxu0 %v430
  %v450 = vpop.f32.mrf.mxu0
  %v451 = vadd.f32 1e-06, %v450
  %v452 = vpop.f32.mrf.mxu0
  %v453 = vadd.f32 1e-06, %v452
  %454 = vmatmul.bf16.gmra.mxu0 %v433
  %v455 = vpop.f32.mrf.mxu0
  %v456 = vadd.f32 1e-06, %v455
  %v457 = vpop.f32.mrf.mxu0
  %v458 = vadd.f32 1e-06, %v457
  %459 = vmatmul.bf16.gmra.mxu0 %v436
  %v460 = vpop.f32.mrf.mxu0
  %v461 = vadd.f32 1e-06, %v460
  %v462 = vpop.f32.mrf.mxu0
  %v463 = vadd.f32 1e-06, %v462
  %464 = vmatmul.bf16.gmra.mxu0 %v439
  %v465 = vpop.f32.mrf.mxu0
  %v466 = vadd.f32 1e-06, %v465
  %v467 = vpop.f32.mrf.mxu0
  %v468 = vadd.f32 1e-06, %v467
  %469 = vdwg.mxu0
  %v470 = vrcp.pop %v451
  %v471 = vrcp.pop %v453
  %v472 = vrcp.pop %v456
  %v473 = vrcp.pop %v458
  %v474 = vrcp.pop %v461
  %v475 = vrcp.pop %v463
  %v476 = vrcp.pop %v466
  %v477 = vrcp.pop %v468
  %v478 = vpack.c.bf16 %v362, %v361
  %v479 = vpack.c.bf16 %v364, %v363
  %v480 = vpack.c.bf16 %v366, %v365
  %v481 = vpack.c.bf16 %v368, %v367
  %486 = vrot.lane.b32.xlu0 %v478, 96
  %v487 = vpop.permute.xlu0 %486
  %488 = vrot.lane.b32.xlu0 %v479, 96
  %v489 = vpop.permute.xlu0 %488
  %490 = vrot.lane.b32.xlu0 %v480, 96
  %v491 = vpop.permute.xlu0 %490
  %492 = vrot.lane.b32.xlu0 %v481, 96
  %v493 = vpop.permute.xlu0 %492
  %498 = vxpose.xlu0.c.b16.start [1/8] %v487, 128
  %499 = vxpose.xlu0.c.b16.cont [2/8] %v489, 128
  %500 = vxpose.xlu0.c.b16.cont [3/8] %v491, 128
  %501 = vxpose.xlu0.c.b16.cont [4/8] %v493, 128
  %502 = vxpose.xlu0.c.b16.cont [5/8] 0, 128
  %503 = vxpose.xlu0.c.b16.cont [6/8] 0, 128
  %504 = vxpose.xlu0.c.b16.cont [7/8] 0, 128
  %505 = vxpose.xlu0.c.b16.end [8/8] 0, 128
  %v506 = vpop.trf.xlu0
  %v507 = vpop.trf.xlu0
  %v508 = vpop.trf.xlu0
  %v509 = vpop.trf.xlu0
  %v510 = vpop.trf.xlu0
  %v511 = vpop.trf.xlu0
  %v512 = vpop.trf.xlu0
  %v513 = vpop.trf.xlu0
  %vm518 = vcmask 523264
  %v520 = vsel %vm518, %v506, 0
  %v523 = vsel %vm518, %v507, 0
  %525 = vmatpush.bf16.msra.mxu0 0
  %526 = vmatpush.bf16.msra.mxu0 0
  %527 = vmatpush.bf16.msra.mxu0 0
  %528 = vmatpush.bf16.msra.mxu0 0
  %529 = vmatpush.bf16.msra.mxu0 %v94
  %530 = vmatpush.bf16.msra.mxu0 %v93
  %531 = vmatpush.bf16.msra.mxu0 %v92
  %532 = vmatpush.bf16.msra.mxu0 %v91
  %533 = vmatmul.bf16.gmra.mxu0 %v520
  %v534 = vpop.f32.mrf.mxu0
  %v535 = vadd.f32 0.0, %v534
  %v536 = vpop.f32.mrf.mxu0
  %v537 = vadd.f32 0.0, %v536
  %538 = vmatmul.bf16.gmra.mxu0 %v523
  %v539 = vpop.f32.mrf.mxu0
  %v540 = vadd.f32 0.0, %v539
  %v541 = vpop.f32.mrf.mxu0
  %v542 = vadd.f32 0.0, %v541
  %543 = vdwg.mxu0
  %v544 = vmul.f32 %v535, 0.015625
  %v545 = vmul.f32 %v537, 0.015625
  %v546 = vmul.f32 %v540, 0.015625
  %v547 = vmul.f32 %v542, 0.015625
  %v548 = vmul.f32 %v544, %v377
  %v549 = vmul.f32 %v545, %v378
  %v550 = vmul.f32 %v546, %v379
  %v551 = vmul.f32 %v547, %v380
  %v552 = vpack.c.bf16 %v549, %v548
  %v553 = vpack.c.bf16 %v551, %v550
  %v555 = vsel %vm111, %v478, 0
  %v558 = vsel %vm111, %v479, 0
  %v561 = vsel %vm111, %v480, 0
  %v564 = vsel %vm111, %v481, 0
  %566 = vmatpush.bf16.msra.mxu0 0
  %567 = vmatpush.bf16.msra.mxu0 0
  %568 = vmatpush.bf16.msra.mxu0 0
  %569 = vmatpush.bf16.msra.mxu0 0
  %570 = vmatpush.bf16.msra.mxu0 0
  %571 = vmatpush.bf16.msra.mxu0 0
  %572 = vmatpush.bf16.msra.mxu0 %v553
  %573 = vmatpush.bf16.msra.mxu0 %v552
  %574 = vmatmul.bf16.gmra.mxu0 %v555
  %v575 = vpop.f32.mrf.mxu0
  %v576 = vadd.f32 0.0, %v575
  %v577 = vpop.f32.mrf.mxu0
  %v578 = vadd.f32 0.0, %v577
  %579 = vmatmul.bf16.gmra.mxu0 %v558
  %v580 = vpop.f32.mrf.mxu0
  %v581 = vadd.f32 0.0, %v580
  %v582 = vpop.f32.mrf.mxu0
  %v583 = vadd.f32 0.0, %v582
  %584 = vmatmul.bf16.gmra.mxu0 %v561
  %v585 = vpop.f32.mrf.mxu0
  %v586 = vadd.f32 0.0, %v585
  %v587 = vpop.f32.mrf.mxu0
  %v588 = vadd.f32 0.0, %v587
  %589 = vmatmul.bf16.gmra.mxu0 %v564
  %v590 = vpop.f32.mrf.mxu0
  %v591 = vadd.f32 0.0, %v590
  %v592 = vpop.f32.mrf.mxu0
  %v593 = vadd.f32 0.0, %v592
  %594 = vdwg.mxu0
  %v595 = vmul.f32 %v576, %v470
  %v596 = vmul.f32 %v578, %v471
  %v597 = vmul.f32 %v581, %v472
  %v598 = vmul.f32 %v583, %v473
  %v599 = vmul.f32 %v586, %v474
  %v600 = vmul.f32 %v588, %v475
  %v601 = vmul.f32 %v591, %v476
  %v602 = vmul.f32 %v593, %v477
  %v603 = vsel %vm383, %v257, 0.0
  %v604 = vsel %vm383, %v258, 0.0
  %v605 = vadd.f32 %v603, %v604
  %v606 = vsel %vm383, %v259, 0.0
  %v607 = vadd.f32 %v605, %v606
  %v608 = vsel %vm383, %v260, 0.0
  %v609 = vadd.f32 %v607, %v608
  %v610 = vsel %vm383, %v261, 0.0
  %v611 = vadd.f32 %v609, %v610
  %v612 = vsel %vm383, %v262, 0.0
  %v613 = vadd.f32 %v611, %v612
  %v614 = vsel %vm383, %v263, 0.0
  %v615 = vadd.f32 %v613, %v614
  %v616 = vsel %vm383, %v264, 0.0
  %v617 = vadd.f32 %v615, %v616
  %v618 = vrot.slane %v617, 4
  %v619 = vadd.f32 %v617, %v618
  %v620 = vrot.slane %v619, 2
  %v621 = vadd.f32 %v619, %v620
  %v622 = vrot.slane %v621, 1
  %v623 = vadd.f32 %v621, %v622
  %v624 = vmul.f32 %v623, %v411
  %626 = vrot.lane.b32.xlu0 %v624, 96
  %v627 = vpop.permute.xlu0 %626
  %v629 = vmul.f32 %v257, %v627
  %v630 = vmul.f32 %v258, %v627
  %v631 = vmul.f32 %v259, %v627
  %v632 = vmul.f32 %v260, %v627
  %v633 = vmul.f32 %v261, %v627
  %v634 = vmul.f32 %v262, %v627
  %v635 = vmul.f32 %v263, %v627
  %v636 = vmul.f32 %v264, %v627
  %v637 = vpack.c.bf16 %v630, %v629
  %v638 = vpack.c.bf16 %v632, %v631
  %v639 = vpack.c.bf16 %v634, %v633
  %v640 = vpack.c.bf16 %v636, %v635
  %v642 = vsel %vm111, %v637, 0
  %v645 = vsel %vm111, %v638, 0
  %v648 = vsel %vm111, %v639, 0
  %v651 = vsel %vm111, %v640, 0
  %653 = vmatpush.bf16.msra.mxu0 0
  %654 = vmatpush.bf16.msra.mxu0 0
  %655 = vmatpush.bf16.msra.mxu0 0
  %656 = vmatpush.bf16.msra.mxu0 0
  %657 = vmatpush.bf16.msra.mxu0 0
  %658 = vmatpush.bf16.msra.mxu0 0
  %659 = vmatpush.bf16.msra.mxu0 %v382
  %660 = vmatpush.bf16.msra.mxu0 %v381
  %661 = vmatmul.bf16.gmra.mxu0 %v642
  %v662 = vpop.f32.mrf.mxu0
  %v663 = vadd.f32 1e-06, %v662
  %v664 = vpop.f32.mrf.mxu0
  %v665 = vadd.f32 1e-06, %v664
  %666 = vmatmul.bf16.gmra.mxu0 %v645
  %v667 = vpop.f32.mrf.mxu0
  %v668 = vadd.f32 1e-06, %v667
  %v669 = vpop.f32.mrf.mxu0
  %v670 = vadd.f32 1e-06, %v669
  %671 = vmatmul.bf16.gmra.mxu0 %v648
  %v672 = vpop.f32.mrf.mxu0
  %v673 = vadd.f32 1e-06, %v672
  %v674 = vpop.f32.mrf.mxu0
  %v675 = vadd.f32 1e-06, %v674
  %676 = vmatmul.bf16.gmra.mxu0 %v651
  %v677 = vpop.f32.mrf.mxu0
  %v678 = vadd.f32 1e-06, %v677
  %v679 = vpop.f32.mrf.mxu0
  %v680 = vadd.f32 1e-06, %v679
  %681 = vdwg.mxu0
  %v682 = vrcp.pop %v663
  %v683 = vrcp.pop %v665
  %v684 = vrcp.pop %v668
  %v685 = vrcp.pop %v670
  %v686 = vrcp.pop %v673
  %v687 = vrcp.pop %v675
  %v688 = vrcp.pop %v678
  %v689 = vrcp.pop %v680
  %v690 = vpack.c.bf16 %v370, %v369
  %v691 = vpack.c.bf16 %v372, %v371
  %v692 = vpack.c.bf16 %v374, %v373
  %v693 = vpack.c.bf16 %v376, %v375
  %698 = vrot.lane.b32.xlu0 %v690, 96
  %v699 = vpop.permute.xlu0 %698
  %700 = vrot.lane.b32.xlu0 %v691, 96
  %v701 = vpop.permute.xlu0 %700
  %702 = vrot.lane.b32.xlu0 %v692, 96
  %v703 = vpop.permute.xlu0 %702
  %704 = vrot.lane.b32.xlu0 %v693, 96
  %v705 = vpop.permute.xlu0 %704
  %710 = vxpose.xlu0.c.b16.start [1/8] %v699, 128
  %711 = vxpose.xlu0.c.b16.cont [2/8] %v701, 128
  %712 = vxpose.xlu0.c.b16.cont [3/8] %v703, 128
  %713 = vxpose.xlu0.c.b16.cont [4/8] %v705, 128
  %714 = vxpose.xlu0.c.b16.cont [5/8] 0, 128
  %715 = vxpose.xlu0.c.b16.cont [6/8] 0, 128
  %716 = vxpose.xlu0.c.b16.cont [7/8] 0, 128
  %717 = vxpose.xlu0.c.b16.end [8/8] 0, 128
  %v718 = vpop.trf.xlu0
  %v719 = vpop.trf.xlu0
  %v720 = vpop.trf.xlu0
  %v721 = vpop.trf.xlu0
  %v722 = vpop.trf.xlu0
  %v723 = vpop.trf.xlu0
  %v724 = vpop.trf.xlu0
  %v725 = vpop.trf.xlu0
  %v731 = vsel %vm518, %v718, 0
  %v734 = vsel %vm518, %v719, 0
  %736 = vmatpush.bf16.msra.mxu0 0
  %737 = vmatpush.bf16.msra.mxu0 0
  %738 = vmatpush.bf16.msra.mxu0 0
  %739 = vmatpush.bf16.msra.mxu0 0
  %740 = vmatpush.bf16.msra.mxu0 %v98
  %741 = vmatpush.bf16.msra.mxu0 %v97
  %742 = vmatpush.bf16.msra.mxu0 %v96
  %743 = vmatpush.bf16.msra.mxu0 %v95
  %744 = vmatmul.bf16.gmra.mxu0 %v731
  %v745 = vpop.f32.mrf.mxu0
  %v746 = vadd.f32 0.0, %v745
  %v747 = vpop.f32.mrf.mxu0
  %v748 = vadd.f32 0.0, %v747
  %749 = vmatmul.bf16.gmra.mxu0 %v734
  %v750 = vpop.f32.mrf.mxu0
  %v751 = vadd.f32 0.0, %v750
  %v752 = vpop.f32.mrf.mxu0
  %v753 = vadd.f32 0.0, %v752
  %754 = vdwg.mxu0
  %v755 = vmul.f32 %v746, 0.015625
  %v756 = vmul.f32 %v748, 0.015625
  %v757 = vmul.f32 %v751, 0.015625
  %v758 = vmul.f32 %v753, 0.015625
  %v759 = vmul.f32 %v755, %v377
  %v760 = vmul.f32 %v756, %v378
  %v761 = vmul.f32 %v757, %v379
  %v762 = vmul.f32 %v758, %v380
  %v763 = vpack.c.bf16 %v760, %v759
  %v764 = vpack.c.bf16 %v762, %v761
  %v766 = vsel %vm111, %v690, 0
  %v769 = vsel %vm111, %v691, 0
  %v772 = vsel %vm111, %v692, 0
  %v775 = vsel %vm111, %v693, 0
  %777 = vmatpush.bf16.msra.mxu0 0
  %778 = vmatpush.bf16.msra.mxu0 0
  %779 = vmatpush.bf16.msra.mxu0 0
  %780 = vmatpush.bf16.msra.mxu0 0
  %781 = vmatpush.bf16.msra.mxu0 0
  %782 = vmatpush.bf16.msra.mxu0 0
  %783 = vmatpush.bf16.msra.mxu0 %v764
  %784 = vmatpush.bf16.msra.mxu0 %v763
  %785 = vmatmul.bf16.gmra.mxu0 %v766
  %v786 = vpop.f32.mrf.mxu0
  %v787 = vadd.f32 0.0, %v786
  %v788 = vpop.f32.mrf.mxu0
  %v789 = vadd.f32 0.0, %v788
  %790 = vmatmul.bf16.gmra.mxu0 %v769
  %v791 = vpop.f32.mrf.mxu0
  %v792 = vadd.f32 0.0, %v791
  %v793 = vpop.f32.mrf.mxu0
  %v794 = vadd.f32 0.0, %v793
  %795 = vmatmul.bf16.gmra.mxu0 %v772
  %v796 = vpop.f32.mrf.mxu0
  %v797 = vadd.f32 0.0, %v796
  %v798 = vpop.f32.mrf.mxu0
  %v799 = vadd.f32 0.0, %v798
  %800 = vmatmul.bf16.gmra.mxu0 %v775
  %v801 = vpop.f32.mrf.mxu0
  %v802 = vadd.f32 0.0, %v801
  %v803 = vpop.f32.mrf.mxu0
  %v804 = vadd.f32 0.0, %v803
  %805 = vdwg.mxu0
  %v806 = vmul.f32 %v787, %v682
  %v807 = vmul.f32 %v789, %v683
  %v808 = vmul.f32 %v792, %v684
  %v809 = vmul.f32 %v794, %v685
  %v810 = vmul.f32 %v797, %v686
  %v811 = vmul.f32 %v799, %v687
  %v812 = vmul.f32 %v802, %v688
  %v813 = vmul.f32 %v804, %v689
  %v814 = vld [vmem:[%s4 + $0x20] sm:$0xff]
  %v815 = vld [vmem:[%s4 + $0x28] sm:$0x1]
  %v816 = vld [vmem:[%s1] sm:$0xff]
  %v817 = vld [vmem:[%s1 + $0x8] sm:$0xff]
  %v818 = vld [vmem:[%s1 + $0x10] sm:$0xff]
  %v819 = vld [vmem:[%s1 + $0x18] sm:$0xff]
  %v820 = vld [vmem:[%s1 + $0x20] sm:$0xff]
  %v821 = vld [vmem:[%s1 + $0x28] sm:$0xff]
  %v822 = vld [vmem:[%s1 + $0x30] sm:$0xff]
  %v823 = vld [vmem:[%s1 + $0x38] sm:$0xff]
  %v824 = vld [vmem:[%s1 + $0x40] sm:$0xff]
  %v825 = vld [vmem:[%s1 + $0x48] sm:$0xff]
  %v826 = vld [vmem:[%s1 + $0x50] sm:$0xff]
  %v827 = vld [vmem:[%s1 + $0x58] sm:$0xff]
  %v828 = vld [vmem:[%s1 + $0x60] sm:$0xff]
  %v829 = vld [vmem:[%s1 + $0x68] sm:$0xff]
  %v830 = vld [vmem:[%s1 + $0x70] sm:$0xff]
  %v831 = vld [vmem:[%s1 + $0x78] sm:$0xff]
  %v832 = vperm.slane %v814, 0
  %v833 = vmul.f32 %v816, %v832
  %v834 = vmul.f32 %v817, %v832
  %v835 = vmul.f32 %v818, %v832
  %v836 = vmul.f32 %v819, %v832
  %v837 = vmul.f32 %v820, %v832
  %v838 = vmul.f32 %v821, %v832
  %v839 = vmul.f32 %v822, %v832
  %v840 = vmul.f32 %v823, %v832
  %v841 = vmul.f32 %v824, %v832
  %v842 = vmul.f32 %v825, %v832
  %v843 = vmul.f32 %v826, %v832
  %v844 = vmul.f32 %v827, %v832
  %v845 = vmul.f32 %v828, %v832
  %v846 = vmul.f32 %v829, %v832
  %v847 = vmul.f32 %v830, %v832
  %v848 = vmul.f32 %v831, %v832
  %v849 = vadd.f32 %v833, 0.0
  %v850 = vadd.f32 %v834, 0.0
  %v851 = vadd.f32 %v835, 0.0
  %v852 = vadd.f32 %v836, 0.0
  %v853 = vadd.f32 %v837, 0.0
  %v854 = vadd.f32 %v838, 0.0
  %v855 = vadd.f32 %v839, 0.0
  %v856 = vadd.f32 %v840, 0.0
  %v857 = vadd.f32 %v841, 0.0
  %v858 = vadd.f32 %v842, 0.0
  %v859 = vadd.f32 %v843, 0.0
  %v860 = vadd.f32 %v844, 0.0
  %v861 = vadd.f32 %v845, 0.0
  %v862 = vadd.f32 %v846, 0.0
  %v863 = vadd.f32 %v847, 0.0
  %v864 = vadd.f32 %v848, 0.0
  %s865 = scalar_lea.vmem %s1, 128
  %v866 = vld [vmem:[%s865] sm:$0xff]
  %v867 = vld [vmem:[%s865 + $0x8] sm:$0xff]
  %v868 = vld [vmem:[%s865 + $0x10] sm:$0xff]
  %v869 = vld [vmem:[%s865 + $0x18] sm:$0xff]
  %v870 = vld [vmem:[%s865 + $0x20] sm:$0xff]
  %v871 = vld [vmem:[%s865 + $0x28] sm:$0xff]
  %v872 = vld [vmem:[%s865 + $0x30] sm:$0xff]
  %v873 = vld [vmem:[%s865 + $0x38] sm:$0xff]
  %v874 = vld [vmem:[%s865 + $0x40] sm:$0xff]
  %v875 = vld [vmem:[%s865 + $0x48] sm:$0xff]
  %v876 = vld [vmem:[%s865 + $0x50] sm:$0xff]
  %v877 = vld [vmem:[%s865 + $0x58] sm:$0xff]
  %v878 = vld [vmem:[%s865 + $0x60] sm:$0xff]
  %v879 = vld [vmem:[%s865 + $0x68] sm:$0xff]
  %v880 = vld [vmem:[%s865 + $0x70] sm:$0xff]
  %v881 = vld [vmem:[%s865 + $0x78] sm:$0xff]
  %v882 = vperm.slane %v814, 1
  %v883 = vmul.f32 %v866, %v882
  %v884 = vmul.f32 %v867, %v882
  %v885 = vmul.f32 %v868, %v882
  %v886 = vmul.f32 %v869, %v882
  %v887 = vmul.f32 %v870, %v882
  %v888 = vmul.f32 %v871, %v882
  %v889 = vmul.f32 %v872, %v882
  %v890 = vmul.f32 %v873, %v882
  %v891 = vmul.f32 %v874, %v882
  %v892 = vmul.f32 %v875, %v882
  %v893 = vmul.f32 %v876, %v882
  %v894 = vmul.f32 %v877, %v882
  %v895 = vmul.f32 %v878, %v882
  %v896 = vmul.f32 %v879, %v882
  %v897 = vmul.f32 %v880, %v882
  %v898 = vmul.f32 %v881, %v882
  %v899 = vadd.f32 %v849, %v883
  %v900 = vadd.f32 %v850, %v884
  %v901 = vadd.f32 %v851, %v885
  %v902 = vadd.f32 %v852, %v886
  %v903 = vadd.f32 %v853, %v887
  %v904 = vadd.f32 %v854, %v888
  %v905 = vadd.f32 %v855, %v889
  %v906 = vadd.f32 %v856, %v890
  %v907 = vadd.f32 %v857, %v891
  %v908 = vadd.f32 %v858, %v892
  %v909 = vadd.f32 %v859, %v893
  %v910 = vadd.f32 %v860, %v894
  %v911 = vadd.f32 %v861, %v895
  %v912 = vadd.f32 %v862, %v896
  %v913 = vadd.f32 %v863, %v897
  %v914 = vadd.f32 %v864, %v898
  %s915 = scalar_lea.vmem %s1, 256
  %v916 = vld [vmem:[%s915] sm:$0xff]
  %v917 = vld [vmem:[%s915 + $0x8] sm:$0xff]
  %v918 = vld [vmem:[%s915 + $0x10] sm:$0xff]
  %v919 = vld [vmem:[%s915 + $0x18] sm:$0xff]
  %v920 = vld [vmem:[%s915 + $0x20] sm:$0xff]
  %v921 = vld [vmem:[%s915 + $0x28] sm:$0xff]
  %v922 = vld [vmem:[%s915 + $0x30] sm:$0xff]
  %v923 = vld [vmem:[%s915 + $0x38] sm:$0xff]
  %v924 = vld [vmem:[%s915 + $0x40] sm:$0xff]
  %v925 = vld [vmem:[%s915 + $0x48] sm:$0xff]
  %v926 = vld [vmem:[%s915 + $0x50] sm:$0xff]
  %v927 = vld [vmem:[%s915 + $0x58] sm:$0xff]
  %v928 = vld [vmem:[%s915 + $0x60] sm:$0xff]
  %v929 = vld [vmem:[%s915 + $0x68] sm:$0xff]
  %v930 = vld [vmem:[%s915 + $0x70] sm:$0xff]
  %v931 = vld [vmem:[%s915 + $0x78] sm:$0xff]
  %v932 = vperm.slane %v814, 2
  %v933 = vmul.f32 %v916, %v932
  %v934 = vmul.f32 %v917, %v932
  %v935 = vmul.f32 %v918, %v932
  %v936 = vmul.f32 %v919, %v932
  %v937 = vmul.f32 %v920, %v932
  %v938 = vmul.f32 %v921, %v932
  %v939 = vmul.f32 %v922, %v932
  %v940 = vmul.f32 %v923, %v932
  %v941 = vmul.f32 %v924, %v932
  %v942 = vmul.f32 %v925, %v932
  %v943 = vmul.f32 %v926, %v932
  %v944 = vmul.f32 %v927, %v932
  %v945 = vmul.f32 %v928, %v932
  %v946 = vmul.f32 %v929, %v932
  %v947 = vmul.f32 %v930, %v932
  %v948 = vmul.f32 %v931, %v932
  %v949 = vadd.f32 %v899, %v933
  %v950 = vadd.f32 %v900, %v934
  %v951 = vadd.f32 %v901, %v935
  %v952 = vadd.f32 %v902, %v936
  %v953 = vadd.f32 %v903, %v937
  %v954 = vadd.f32 %v904, %v938
  %v955 = vadd.f32 %v905, %v939
  %v956 = vadd.f32 %v906, %v940
  %v957 = vadd.f32 %v907, %v941
  %v958 = vadd.f32 %v908, %v942
  %v959 = vadd.f32 %v909, %v943
  %v960 = vadd.f32 %v910, %v944
  %v961 = vadd.f32 %v911, %v945
  %v962 = vadd.f32 %v912, %v946
  %v963 = vadd.f32 %v913, %v947
  %v964 = vadd.f32 %v914, %v948
  %s965 = scalar_lea.vmem %s1, 384
  %v966 = vld [vmem:[%s965] sm:$0xff]
  %v967 = vld [vmem:[%s965 + $0x8] sm:$0xff]
  %v968 = vld [vmem:[%s965 + $0x10] sm:$0xff]
  %v969 = vld [vmem:[%s965 + $0x18] sm:$0xff]
  %v970 = vld [vmem:[%s965 + $0x20] sm:$0xff]
  %v971 = vld [vmem:[%s965 + $0x28] sm:$0xff]
  %v972 = vld [vmem:[%s965 + $0x30] sm:$0xff]
  %v973 = vld [vmem:[%s965 + $0x38] sm:$0xff]
  %v974 = vld [vmem:[%s965 + $0x40] sm:$0xff]
  %v975 = vld [vmem:[%s965 + $0x48] sm:$0xff]
  %v976 = vld [vmem:[%s965 + $0x50] sm:$0xff]
  %v977 = vld [vmem:[%s965 + $0x58] sm:$0xff]
  %v978 = vld [vmem:[%s965 + $0x60] sm:$0xff]
  %v979 = vld [vmem:[%s965 + $0x68] sm:$0xff]
  %v980 = vld [vmem:[%s965 + $0x70] sm:$0xff]
  %v981 = vld [vmem:[%s965 + $0x78] sm:$0xff]
  %v982 = vperm.slane %v814, 3
  %v983 = vmul.f32 %v966, %v982
  %v984 = vmul.f32 %v967, %v982
  %v985 = vmul.f32 %v968, %v982
  %v986 = vmul.f32 %v969, %v982
  %v987 = vmul.f32 %v970, %v982
  %v988 = vmul.f32 %v971, %v982
  %v989 = vmul.f32 %v972, %v982
  %v990 = vmul.f32 %v973, %v982
  %v991 = vmul.f32 %v974, %v982
  %v992 = vmul.f32 %v975, %v982
  %v993 = vmul.f32 %v976, %v982
  %v994 = vmul.f32 %v977, %v982
  %v995 = vmul.f32 %v978, %v982
  %v996 = vmul.f32 %v979, %v982
  %v997 = vmul.f32 %v980, %v982
  %v998 = vmul.f32 %v981, %v982
  %v999 = vadd.f32 %v949, %v983
  %v1000 = vadd.f32 %v950, %v984
  %v1001 = vadd.f32 %v951, %v985
  %v1002 = vadd.f32 %v952, %v986
  %v1003 = vadd.f32 %v953, %v987
  %v1004 = vadd.f32 %v954, %v988
  %v1005 = vadd.f32 %v955, %v989
  %v1006 = vadd.f32 %v956, %v990
  %v1007 = vadd.f32 %v957, %v991
  %v1008 = vadd.f32 %v958, %v992
  %v1009 = vadd.f32 %v959, %v993
  %v1010 = vadd.f32 %v960, %v994
  %v1011 = vadd.f32 %v961, %v995
  %v1012 = vadd.f32 %v962, %v996
  %v1013 = vadd.f32 %v963, %v997
  %v1014 = vadd.f32 %v964, %v998
  %s1015 = scalar_lea.vmem %s1, 512
  %v1016 = vld [vmem:[%s1015] sm:$0xff]
  %v1017 = vld [vmem:[%s1015 + $0x8] sm:$0xff]
  %v1018 = vld [vmem:[%s1015 + $0x10] sm:$0xff]
  %v1019 = vld [vmem:[%s1015 + $0x18] sm:$0xff]
  %v1020 = vld [vmem:[%s1015 + $0x20] sm:$0xff]
  %v1021 = vld [vmem:[%s1015 + $0x28] sm:$0xff]
  %v1022 = vld [vmem:[%s1015 + $0x30] sm:$0xff]
  %v1023 = vld [vmem:[%s1015 + $0x38] sm:$0xff]
  %v1024 = vld [vmem:[%s1015 + $0x40] sm:$0xff]
  %v1025 = vld [vmem:[%s1015 + $0x48] sm:$0xff]
  %v1026 = vld [vmem:[%s1015 + $0x50] sm:$0xff]
  %v1027 = vld [vmem:[%s1015 + $0x58] sm:$0xff]
  %v1028 = vld [vmem:[%s1015 + $0x60] sm:$0xff]
  %v1029 = vld [vmem:[%s1015 + $0x68] sm:$0xff]
  %v1030 = vld [vmem:[%s1015 + $0x70] sm:$0xff]
  %v1031 = vld [vmem:[%s1015 + $0x78] sm:$0xff]
  %v1032 = vperm.slane %v814, 4
  %v1033 = vmul.f32 %v1016, %v1032
  %v1034 = vmul.f32 %v1017, %v1032
  %v1035 = vmul.f32 %v1018, %v1032
  %v1036 = vmul.f32 %v1019, %v1032
  %v1037 = vmul.f32 %v1020, %v1032
  %v1038 = vmul.f32 %v1021, %v1032
  %v1039 = vmul.f32 %v1022, %v1032
  %v1040 = vmul.f32 %v1023, %v1032
  %v1041 = vmul.f32 %v1024, %v1032
  %v1042 = vmul.f32 %v1025, %v1032
  %v1043 = vmul.f32 %v1026, %v1032
  %v1044 = vmul.f32 %v1027, %v1032
  %v1045 = vmul.f32 %v1028, %v1032
  %v1046 = vmul.f32 %v1029, %v1032
  %v1047 = vmul.f32 %v1030, %v1032
  %v1048 = vmul.f32 %v1031, %v1032
  %v1049 = vadd.f32 %v999, %v1033
  %v1050 = vadd.f32 %v1000, %v1034
  %v1051 = vadd.f32 %v1001, %v1035
  %v1052 = vadd.f32 %v1002, %v1036
  %v1053 = vadd.f32 %v1003, %v1037
  %v1054 = vadd.f32 %v1004, %v1038
  %v1055 = vadd.f32 %v1005, %v1039
  %v1056 = vadd.f32 %v1006, %v1040
  %v1057 = vadd.f32 %v1007, %v1041
  %v1058 = vadd.f32 %v1008, %v1042
  %v1059 = vadd.f32 %v1009, %v1043
  %v1060 = vadd.f32 %v1010, %v1044
  %v1061 = vadd.f32 %v1011, %v1045
  %v1062 = vadd.f32 %v1012, %v1046
  %v1063 = vadd.f32 %v1013, %v1047
  %v1064 = vadd.f32 %v1014, %v1048
  %s1065 = scalar_lea.vmem %s1, 640
  %v1066 = vld [vmem:[%s1065] sm:$0xff]
  %v1067 = vld [vmem:[%s1065 + $0x8] sm:$0xff]
  %v1068 = vld [vmem:[%s1065 + $0x10] sm:$0xff]
  %v1069 = vld [vmem:[%s1065 + $0x18] sm:$0xff]
  %v1070 = vld [vmem:[%s1065 + $0x20] sm:$0xff]
  %v1071 = vld [vmem:[%s1065 + $0x28] sm:$0xff]
  %v1072 = vld [vmem:[%s1065 + $0x30] sm:$0xff]
  %v1073 = vld [vmem:[%s1065 + $0x38] sm:$0xff]
  %v1074 = vld [vmem:[%s1065 + $0x40] sm:$0xff]
  %v1075 = vld [vmem:[%s1065 + $0x48] sm:$0xff]
  %v1076 = vld [vmem:[%s1065 + $0x50] sm:$0xff]
  %v1077 = vld [vmem:[%s1065 + $0x58] sm:$0xff]
  %v1078 = vld [vmem:[%s1065 + $0x60] sm:$0xff]
  %v1079 = vld [vmem:[%s1065 + $0x68] sm:$0xff]
  %v1080 = vld [vmem:[%s1065 + $0x70] sm:$0xff]
  %v1081 = vld [vmem:[%s1065 + $0x78] sm:$0xff]
  %v1082 = vperm.slane %v814, 5
  %v1083 = vmul.f32 %v1066, %v1082
  %v1084 = vmul.f32 %v1067, %v1082
  %v1085 = vmul.f32 %v1068, %v1082
  %v1086 = vmul.f32 %v1069, %v1082
  %v1087 = vmul.f32 %v1070, %v1082
  %v1088 = vmul.f32 %v1071, %v1082
  %v1089 = vmul.f32 %v1072, %v1082
  %v1090 = vmul.f32 %v1073, %v1082
  %v1091 = vmul.f32 %v1074, %v1082
  %v1092 = vmul.f32 %v1075, %v1082
  %v1093 = vmul.f32 %v1076, %v1082
  %v1094 = vmul.f32 %v1077, %v1082
  %v1095 = vmul.f32 %v1078, %v1082
  %v1096 = vmul.f32 %v1079, %v1082
  %v1097 = vmul.f32 %v1080, %v1082
  %v1098 = vmul.f32 %v1081, %v1082
  %v1099 = vadd.f32 %v1049, %v1083
  %v1100 = vadd.f32 %v1050, %v1084
  %v1101 = vadd.f32 %v1051, %v1085
  %v1102 = vadd.f32 %v1052, %v1086
  %v1103 = vadd.f32 %v1053, %v1087
  %v1104 = vadd.f32 %v1054, %v1088
  %v1105 = vadd.f32 %v1055, %v1089
  %v1106 = vadd.f32 %v1056, %v1090
  %v1107 = vadd.f32 %v1057, %v1091
  %v1108 = vadd.f32 %v1058, %v1092
  %v1109 = vadd.f32 %v1059, %v1093
  %v1110 = vadd.f32 %v1060, %v1094
  %v1111 = vadd.f32 %v1061, %v1095
  %v1112 = vadd.f32 %v1062, %v1096
  %v1113 = vadd.f32 %v1063, %v1097
  %v1114 = vadd.f32 %v1064, %v1098
  %s1115 = scalar_lea.vmem %s1, 768
  %v1116 = vld [vmem:[%s1115] sm:$0xff]
  %v1117 = vld [vmem:[%s1115 + $0x8] sm:$0xff]
  %v1118 = vld [vmem:[%s1115 + $0x10] sm:$0xff]
  %v1119 = vld [vmem:[%s1115 + $0x18] sm:$0xff]
  %v1120 = vld [vmem:[%s1115 + $0x20] sm:$0xff]
  %v1121 = vld [vmem:[%s1115 + $0x28] sm:$0xff]
  %v1122 = vld [vmem:[%s1115 + $0x30] sm:$0xff]
  %v1123 = vld [vmem:[%s1115 + $0x38] sm:$0xff]
  %v1124 = vld [vmem:[%s1115 + $0x40] sm:$0xff]
  %v1125 = vld [vmem:[%s1115 + $0x48] sm:$0xff]
  %v1126 = vld [vmem:[%s1115 + $0x50] sm:$0xff]
  %v1127 = vld [vmem:[%s1115 + $0x58] sm:$0xff]
  %v1128 = vld [vmem:[%s1115 + $0x60] sm:$0xff]
  %v1129 = vld [vmem:[%s1115 + $0x68] sm:$0xff]
  %v1130 = vld [vmem:[%s1115 + $0x70] sm:$0xff]
  %v1131 = vld [vmem:[%s1115 + $0x78] sm:$0xff]
  %v1132 = vperm.slane %v814, 6
  %v1133 = vmul.f32 %v1116, %v1132
  %v1134 = vmul.f32 %v1117, %v1132
  %v1135 = vmul.f32 %v1118, %v1132
  %v1136 = vmul.f32 %v1119, %v1132
  %v1137 = vmul.f32 %v1120, %v1132
  %v1138 = vmul.f32 %v1121, %v1132
  %v1139 = vmul.f32 %v1122, %v1132
  %v1140 = vmul.f32 %v1123, %v1132
  %v1141 = vmul.f32 %v1124, %v1132
  %v1142 = vmul.f32 %v1125, %v1132
  %v1143 = vmul.f32 %v1126, %v1132
  %v1144 = vmul.f32 %v1127, %v1132
  %v1145 = vmul.f32 %v1128, %v1132
  %v1146 = vmul.f32 %v1129, %v1132
  %v1147 = vmul.f32 %v1130, %v1132
  %v1148 = vmul.f32 %v1131, %v1132
  %v1149 = vadd.f32 %v1099, %v1133
  %v1150 = vadd.f32 %v1100, %v1134
  %v1151 = vadd.f32 %v1101, %v1135
  %v1152 = vadd.f32 %v1102, %v1136
  %v1153 = vadd.f32 %v1103, %v1137
  %v1154 = vadd.f32 %v1104, %v1138
  %v1155 = vadd.f32 %v1105, %v1139
  %v1156 = vadd.f32 %v1106, %v1140
  %v1157 = vadd.f32 %v1107, %v1141
  %v1158 = vadd.f32 %v1108, %v1142
  %v1159 = vadd.f32 %v1109, %v1143
  %v1160 = vadd.f32 %v1110, %v1144
  %v1161 = vadd.f32 %v1111, %v1145
  %v1162 = vadd.f32 %v1112, %v1146
  %v1163 = vadd.f32 %v1113, %v1147
  %v1164 = vadd.f32 %v1114, %v1148
  %s1165 = scalar_lea.vmem %s1, 896
  %v1166 = vld [vmem:[%s1165] sm:$0xff]
  %v1167 = vld [vmem:[%s1165 + $0x8] sm:$0xff]
  %v1168 = vld [vmem:[%s1165 + $0x10] sm:$0xff]
  %v1169 = vld [vmem:[%s1165 + $0x18] sm:$0xff]
  %v1170 = vld [vmem:[%s1165 + $0x20] sm:$0xff]
  %v1171 = vld [vmem:[%s1165 + $0x28] sm:$0xff]
  %v1172 = vld [vmem:[%s1165 + $0x30] sm:$0xff]
  %v1173 = vld [vmem:[%s1165 + $0x38] sm:$0xff]
  %v1174 = vld [vmem:[%s1165 + $0x40] sm:$0xff]
  %v1175 = vld [vmem:[%s1165 + $0x48] sm:$0xff]
  %v1176 = vld [vmem:[%s1165 + $0x50] sm:$0xff]
  %v1177 = vld [vmem:[%s1165 + $0x58] sm:$0xff]
  %v1178 = vld [vmem:[%s1165 + $0x60] sm:$0xff]
  %v1179 = vld [vmem:[%s1165 + $0x68] sm:$0xff]
  %v1180 = vld [vmem:[%s1165 + $0x70] sm:$0xff]
  %v1181 = vld [vmem:[%s1165 + $0x78] sm:$0xff]
  %v1182 = vperm.slane %v814, 7
  %v1183 = vmul.f32 %v1166, %v1182
  %v1184 = vmul.f32 %v1167, %v1182
  %v1185 = vmul.f32 %v1168, %v1182
  %v1186 = vmul.f32 %v1169, %v1182
  %v1187 = vmul.f32 %v1170, %v1182
  %v1188 = vmul.f32 %v1171, %v1182
  %v1189 = vmul.f32 %v1172, %v1182
  %v1190 = vmul.f32 %v1173, %v1182
  %v1191 = vmul.f32 %v1174, %v1182
  %v1192 = vmul.f32 %v1175, %v1182
  %v1193 = vmul.f32 %v1176, %v1182
  %v1194 = vmul.f32 %v1177, %v1182
  %v1195 = vmul.f32 %v1178, %v1182
  %v1196 = vmul.f32 %v1179, %v1182
  %v1197 = vmul.f32 %v1180, %v1182
  %v1198 = vmul.f32 %v1181, %v1182
  %v1199 = vadd.f32 %v1149, %v1183
  %v1200 = vadd.f32 %v1150, %v1184
  %v1201 = vadd.f32 %v1151, %v1185
  %v1202 = vadd.f32 %v1152, %v1186
  %v1203 = vadd.f32 %v1153, %v1187
  %v1204 = vadd.f32 %v1154, %v1188
  %v1205 = vadd.f32 %v1155, %v1189
  %v1206 = vadd.f32 %v1156, %v1190
  %v1207 = vadd.f32 %v1157, %v1191
  %v1208 = vadd.f32 %v1158, %v1192
  %v1209 = vadd.f32 %v1159, %v1193
  %v1210 = vadd.f32 %v1160, %v1194
  %v1211 = vadd.f32 %v1161, %v1195
  %v1212 = vadd.f32 %v1162, %v1196
  %v1213 = vadd.f32 %v1163, %v1197
  %v1214 = vadd.f32 %v1164, %v1198
  %s1215 = scalar_lea.vmem %s1, 1024
  %v1216 = vld [vmem:[%s1215] sm:$0xff]
  %v1217 = vld [vmem:[%s1215 + $0x8] sm:$0xff]
  %v1218 = vld [vmem:[%s1215 + $0x10] sm:$0xff]
  %v1219 = vld [vmem:[%s1215 + $0x18] sm:$0xff]
  %v1220 = vld [vmem:[%s1215 + $0x20] sm:$0xff]
  %v1221 = vld [vmem:[%s1215 + $0x28] sm:$0xff]
  %v1222 = vld [vmem:[%s1215 + $0x30] sm:$0xff]
  %v1223 = vld [vmem:[%s1215 + $0x38] sm:$0xff]
  %v1224 = vld [vmem:[%s1215 + $0x40] sm:$0xff]
  %v1225 = vld [vmem:[%s1215 + $0x48] sm:$0xff]
  %v1226 = vld [vmem:[%s1215 + $0x50] sm:$0xff]
  %v1227 = vld [vmem:[%s1215 + $0x58] sm:$0xff]
  %v1228 = vld [vmem:[%s1215 + $0x60] sm:$0xff]
  %v1229 = vld [vmem:[%s1215 + $0x68] sm:$0xff]
  %v1230 = vld [vmem:[%s1215 + $0x70] sm:$0xff]
  %v1231 = vld [vmem:[%s1215 + $0x78] sm:$0xff]
  %v1232 = vperm.slane %v815, 0
  %v1233 = vmul.f32 %v1216, %v1232
  %v1234 = vmul.f32 %v1217, %v1232
  %v1235 = vmul.f32 %v1218, %v1232
  %v1236 = vmul.f32 %v1219, %v1232
  %v1237 = vmul.f32 %v1220, %v1232
  %v1238 = vmul.f32 %v1221, %v1232
  %v1239 = vmul.f32 %v1222, %v1232
  %v1240 = vmul.f32 %v1223, %v1232
  %v1241 = vmul.f32 %v1224, %v1232
  %v1242 = vmul.f32 %v1225, %v1232
  %v1243 = vmul.f32 %v1226, %v1232
  %v1244 = vmul.f32 %v1227, %v1232
  %v1245 = vmul.f32 %v1228, %v1232
  %v1246 = vmul.f32 %v1229, %v1232
  %v1247 = vmul.f32 %v1230, %v1232
  %v1248 = vmul.f32 %v1231, %v1232
  %v1249 = vadd.f32 %v1199, %v1233
  %v1250 = vadd.f32 %v1200, %v1234
  %v1251 = vadd.f32 %v1201, %v1235
  %v1252 = vadd.f32 %v1202, %v1236
  %v1253 = vadd.f32 %v1203, %v1237
  %v1254 = vadd.f32 %v1204, %v1238
  %v1255 = vadd.f32 %v1205, %v1239
  %v1256 = vadd.f32 %v1206, %v1240
  %v1257 = vadd.f32 %v1207, %v1241
  %v1258 = vadd.f32 %v1208, %v1242
  %v1259 = vadd.f32 %v1209, %v1243
  %v1260 = vadd.f32 %v1210, %v1244
  %v1261 = vadd.f32 %v1211, %v1245
  %v1262 = vadd.f32 %v1212, %v1246
  %v1263 = vadd.f32 %v1213, %v1247
  %v1264 = vadd.f32 %v1214, %v1248
  %v1265 = vadd.f32 %v595, %v1249
  %v1266 = vadd.f32 %v596, %v1250
  %v1267 = vadd.f32 %v597, %v1251
  %v1268 = vadd.f32 %v598, %v1252
  %v1269 = vadd.f32 %v599, %v1253
  %v1270 = vadd.f32 %v600, %v1254
  %v1271 = vadd.f32 %v601, %v1255
  %v1272 = vadd.f32 %v602, %v1256
  %v1273 = vadd.f32 %v806, %v1257
  %v1274 = vadd.f32 %v807, %v1258
  %v1275 = vadd.f32 %v808, %v1259
  %v1276 = vadd.f32 %v809, %v1260
  %v1277 = vadd.f32 %v810, %v1261
  %v1278 = vadd.f32 %v811, %v1262
  %v1279 = vadd.f32 %v812, %v1263
  %v1280 = vadd.f32 %v813, %v1264
  %v1281 = vld [vmem:[%s4 + $0x29] sm:$0x1]
  %v1282 = vperm.slane %v1281, 0
  %v1283 = vadd.f32 %v1265, %v1282
  %v1284 = vadd.f32 %v1266, %v1282
  %v1285 = vadd.f32 %v1267, %v1282
  %v1286 = vadd.f32 %v1268, %v1282
  %v1287 = vadd.f32 %v1269, %v1282
  %v1288 = vadd.f32 %v1270, %v1282
  %v1289 = vadd.f32 %v1271, %v1282
  %v1290 = vadd.f32 %v1272, %v1282
  %v1291 = vadd.f32 %v1273, %v1282
  %v1292 = vadd.f32 %v1274, %v1282
  %v1293 = vadd.f32 %v1275, %v1282
  %v1294 = vadd.f32 %v1276, %v1282
  %v1295 = vadd.f32 %v1277, %v1282
  %v1296 = vadd.f32 %v1278, %v1282
  %v1297 = vadd.f32 %v1279, %v1282
  %v1298 = vadd.f32 %v1280, %v1282
  %1299 = vst.msk [vmem:[%s5] sm:$0xff] %vm111, %v1283
  %1300 = vst.msk [vmem:[%s5 + $0x8] sm:$0xff] %vm111, %v1284
  %1301 = vst.msk [vmem:[%s5 + $0x10] sm:$0xff] %vm111, %v1285
  %1302 = vst.msk [vmem:[%s5 + $0x18] sm:$0xff] %vm111, %v1286
  %1303 = vst.msk [vmem:[%s5 + $0x20] sm:$0xff] %vm111, %v1287
  %1304 = vst.msk [vmem:[%s5 + $0x28] sm:$0xff] %vm111, %v1288
  %1305 = vst.msk [vmem:[%s5 + $0x30] sm:$0xff] %vm111, %v1289
  %1306 = vst.msk [vmem:[%s5 + $0x38] sm:$0xff] %vm111, %v1290
  %1307 = vst.msk [vmem:[%s5 + $0x40] sm:$0xff] %vm111, %v1291
  %1308 = vst.msk [vmem:[%s5 + $0x48] sm:$0xff] %vm111, %v1292
  %1309 = vst.msk [vmem:[%s5 + $0x50] sm:$0xff] %vm111, %v1293
  %1310 = vst.msk [vmem:[%s5 + $0x58] sm:$0xff] %vm111, %v1294
  %1311 = vst.msk [vmem:[%s5 + $0x60] sm:$0xff] %vm111, %v1295
  %1312 = vst.msk [vmem:[%s5 + $0x68] sm:$0xff] %vm111, %v1296
  %1313 = vst.msk [vmem:[%s5 + $0x70] sm:$0xff] %vm111, %v1297
  %1314 = vst.msk [vmem:[%s5 + $0x78] sm:$0xff] %vm111, %v1298
  // Predicated region
  $region22: #{linear_attention.1} parent=0 // pred_check
    _
  $region23: #{linear_attention.1} parent=0 // pred_check_branch
    %1316 = sbr.rel (0) target = $region25
  $region24: #{linear_attention.1} parent=0 // pred_region
    _
  $region25: #{linear_attention.1} parent=0 // pred_fallthru
    _
  // Predicated region
  $region26: #{linear_attention.1} parent=0 // pred_check
    _
  $region27: #{linear_attention.1} parent=0 // pred_check_branch
    %1318 = sbr.rel (0) target = $region29
  $region28: #{linear_attention.1} parent=0 // pred_region
    _
  $region29: #{linear_attention.1} parent=0 // pred_fallthru
    _

</llo_original>
